<compile_context>
chip_gen: v5e
topology: v5e:2x2
jax: 0.10.0
libtpu: 0.0.40
codegen_flags: <defaults>
</compile_context>

<pallas_src>
import math

import jax
import jax.numpy as jnp
from jax import lax
from jax.experimental import pallas as pl
from jax.experimental.pallas import tpu as pltpu


def _make_fused_kernel(N, H, W, Cpad, KH, L):
    """Fused [Conv(k) + BN(train) + ReLU] x L kernel for static shapes.

    Activation layout: rows = (n, h), lanes = (w, c) with c padded to Cpad.
    """
    NH = N * H
    WC = W * Cpad
    M = N * H * W
    inv_m = 1.0 / M
    eps = 1e-5
    pad = KH // 2

    def kernel(x_ref, w_ref, g_ref, b_ref, p_ref, o_ref):
        # x_ref: (NH, WC)        bf16 lane-dense input
        # w_ref: (L, KH*WC, WC)  bf16 banded conv RHS (dx taps folded into bands)
        # g_ref: (L, WC)         f32  BN gamma, pre-tiled per lane
        # b_ref: (L, WC)         f32  BN beta,  pre-tiled per lane
        # p_ref: (WC, WC)        f32  per-channel fold/broadcast matrix
        # o_ref: (NH, WC)        f32  lane-dense output of the last layer
        g_all = g_ref[...]
        b_all = b_ref[...]
        p_mat = p_ref[...]

        # Row-boundary masks for the dy (sublane) shifts, hoisted out of the
        # layer loop. Rows are (n, h): a rolled row is invalid when h + off
        # leaves [0, H) (image top/bottom; also kills cross-batch wraparound).
        h_idx = lax.broadcasted_iota(jnp.int32, (NH, WC), 0) % H
        masks = []
        for dy in range(KH):
            off = dy - pad
            if off == 0:
                masks.append(None)
            elif off < 0:
                masks.append(h_idx >= -off)
            else:
                masks.append(h_idx < H - off)

        cur = x_ref[...].astype(jnp.float32)            # (NH, WC) f32

        for l in range(L):                              # static unroll, L small
            # ---- 3x3 halo: dy via XLU sublane rolls + masks; dx handled by
            #      the banded RHS, so the matmul output is already lane-dense.
            taps = []
            for dy in range(KH):
                off = dy - pad
                t = cur if off == 0 else pltpu.roll(cur, (-off) % NH, axis=0)
                if masks[dy] is not None:
                    t = jnp.where(masks[dy], t, 0.0)
                taps.append(t.astype(jnp.bfloat16))
            x3 = jnp.concatenate(taps, axis=-1)         # (NH, KH*WC) bf16

            # One MXU matmul per layer: (NH, KH*WC) @ (KH*WC, WC) -> (NH, WC).
            z = jnp.dot(x3, w_ref[l], preferred_element_type=jnp.float32)

            # ---- BatchNorm training stats + ReLU, all lane-dense f32.
            # Per-channel fold + broadcast back to (w, c) lanes via a tiny MXU
            # matmul with P[(w,c),(w',c')] = [c == c'] (no cross-tile reshape).
            s1 = jnp.sum(z, axis=0, keepdims=True)                           # (1, WC)
            mean = jnp.dot(s1, p_mat, preferred_element_type=jnp.float32) * inv_m
            d = z - mean
            s2 = jnp.sum(d * d, axis=0, keepdims=True)                       # shifted two-pass var
            var = jnp.dot(s2, p_mat, preferred_element_type=jnp.float32) * inv_m
            scale = g_all[l:l + 1, :] * lax.rsqrt(var + eps)
            # Conv bias omitted: cancelled exactly by the mean subtraction
            # under training-mode BN (reinstate it for eval-mode running stats).
            cur = jnp.maximum(d * scale + b_all[l:l + 1, :], 0.0)

        o_ref[...] = cur                                # unmasked 128-lane store

    return kernel


def _forward(x_nchw, params):
    """Full forward pass: x_nchw (N, Cin, H, W) -> (N, Cout, H, W)."""
    N, Cin, H, W = x_nchw.shape
    L = len(params)
    KH, KW, _, Cout = params[0][0].shape
    pad = KH // 2
    Cpad = max(Cin, Cout)
    NH, WC = N * H, W * Cpad

    # Lane-dense bf16 input: rows = (n, h), lanes = (w, c); channels padded to
    # Cpad (extra channels meet zero weights).
    x = jnp.transpose(x_nchw, (0, 2, 3, 1))                     # NHWC
    x = jnp.pad(x, ((0, 0), (0, 0), (0, 0), (0, Cpad - Cin)))
    x2d = x.reshape(NH, WC).astype(jnp.bfloat16)

    # Banded RHS per layer: for each dy block, the dx taps sit on block
    # (off-)diagonals of a (W*C, W*Cout) matrix, so the matmul result is
    # already in (w, cout) lane order and the W-boundary zero padding falls out
    # of the band running off the edge of the matrix.
    ws, gs, bs = [], [], []
    for (w, _bias, gamma, beta) in params:
        cin_l = w.shape[2]
        w_p = jnp.pad(w, ((0, 0), (0, 0), (0, Cpad - cin_l), (0, Cpad - Cout)))
        blocks = []
        for dy in range(KH):
            B = jnp.zeros((WC, WC), jnp.float32)
            for dx in range(KW):
                B = B + jnp.kron(jnp.eye(W, W, k=pad - dx, dtype=jnp.float32),
                                 w_p[dy, dx])
            blocks.append(B)
        ws.append(jnp.concatenate(blocks, axis=0))               # (KH*WC, WC)
        gs.append(jnp.tile(jnp.pad(gamma, (0, Cpad - Cout)), W))  # (WC,)
        bs.append(jnp.tile(jnp.pad(beta, (0, Cpad - Cout)), W))
    w_stack = jnp.stack(ws).astype(jnp.bfloat16)    # (L, KH*WC, WC) lane-dense
    g_stack = jnp.stack(gs).astype(jnp.float32)     # (L, WC)
    b_stack = jnp.stack(bs).astype(jnp.float32)     # (L, WC)
    p_mat = jnp.kron(jnp.ones((W, W), jnp.float32),
                     jnp.eye(Cpad, dtype=jnp.float32))            # (WC, WC)

    kernel = _make_fused_kernel(N, H, W, Cpad, KH, L)

    # Toy problem: activation (32,128) + weights (~400 KiB) fit easily in VMEM,
    # so one grid step with full-array blocks (see TODOs at top for scaling).
    out2d = pl.pallas_call(
        kernel,
        out_shape=jax.ShapeDtypeStruct((NH, WC), jnp.float32),
        grid=(1,),
        in_specs=[
            pl.BlockSpec((NH, WC), lambda i: (0, 0)),
            pl.BlockSpec((L, KH * WC, WC), lambda i: (0, 0, 0)),
            pl.BlockSpec((L, WC), lambda i: (0, 0)),
            pl.BlockSpec((L, WC), lambda i: (0, 0)),
            pl.BlockSpec((WC, WC), lambda i: (0, 0)),
        ],
        out_specs=pl.BlockSpec((NH, WC), lambda i: (0, 0)),
        compiler_params=pltpu.CompilerParams(
            dimension_semantics=("arbitrary",)),
    )(x2d, w_stack, g_stack, b_stack, p_mat)

    # (NH, WC) row-major is exactly NHWC flat order -> free reshape.
    out = out2d.reshape(N, H, W, Cpad)[..., :Cout]
    return jnp.transpose(out, (0, 3, 1, 2))          # back to NCHW like PyTorch


cnn_feature_extractor = jax.jit(_forward)


def init_params(key, input_channels, output_channels, kernel_size, layers):
    """Deterministic parameter init (PyTorch-style uniform bounds), HWIO weights."""
    params = []
    cin = input_channels
    for _ in range(layers):
        key, kw, kb = jax.random.split(key, 3)
        fan_in = cin * kernel_size * kernel_size
        bound = 1.0 / math.sqrt(fan_in)
        w = jax.random.uniform(
            kw, (kernel_size, kernel_size, cin, output_channels),
            jnp.float32, -bound, bound)
        b = jax.random.uniform(
            kb, (output_channels,), jnp.float32, -bound, bound)
        gamma = jnp.ones((output_channels,), jnp.float32)
        beta = jnp.zeros((output_channels,), jnp.float32)
        params.append((w, b, gamma, beta))
        cin = output_channels
    return params


def _reference(x_nchw, params):
    """Pure-JAX f32 reference (lax conv + bias + BN(train) + ReLU)."""
    x = jnp.transpose(x_nchw, (0, 2, 3, 1))
    for (w, b, gamma, beta) in params:
        y = jax.lax.conv_general_dilated(
            x, w, window_strides=(1, 1), padding="SAME",
            dimension_numbers=("NHWC", "HWIO", "NHWC"))
        y = y + b.reshape(1, 1, 1, -1)
        mean = jnp.mean(y, axis=(0, 1, 2), keepdims=True)
        var = jnp.mean((y - mean) ** 2, axis=(0, 1, 2), keepdims=True)
        y = (y - mean) * jax.lax.rsqrt(var + 1e-5)
        y = y * gamma.reshape(1, 1, 1, -1) + beta.reshape(1, 1, 1, -1)
        x = jnp.maximum(y, 0.0)
    return jnp.transpose(x, (0, 3, 1, 2))


if __name__ == "__main__":
    # Small shapes: batch=2, input_channels=4, output_channels=8, 16x16 spatial.
    N, CIN, COUT, H, W = 2, 4, 8, 16, 16
    KSIZE, LAYERS = 3, 4

    key = jax.random.PRNGKey(0)
    key, kx = jax.random.split(key)
    x = jax.random.normal(kx, (N, CIN, H, W), jnp.float32)  # NCHW like PyTorch

    params = init_params(key, CIN, COUT, KSIZE, LAYERS)

    out = jax.block_until_ready(cnn_feature_extractor(x, params))
    assert out.shape == (N, COUT, H, W), out.shape

    ref = jax.block_until_ready(_reference(x, params))
    # MXU operands are bf16 (f32 accumulation / stats), so tolerance is 3e-2 vs.
    # the pure-f32 reference; error grows with layer count under bf16 rounding.
    err = float(jnp.max(jnp.abs(out - ref)))
    assert jnp.allclose(out, ref, atol=3e-2, rtol=3e-2), err

    print("KERNEL_OK")
</pallas_src>

<mosaic_0001>
module attributes {stable_mosaic.version = 11 : i64} {
  func.func @kernel(%arg0: i32, %arg1: memref<32x128xbf16, #tpu.memory_space<vmem>>, %arg2: memref<4x384x128xbf16, #tpu.memory_space<vmem>>, %arg3: memref<4x128xf32, #tpu.memory_space<vmem>>, %arg4: memref<4x128xf32, #tpu.memory_space<vmem>>, %arg5: memref<128x128xf32, #tpu.memory_space<vmem>>, %arg6: memref<32x128xf32, #tpu.memory_space<vmem>>) attributes {dimension_semantics = [#tpu.dimension_semantics<arbitrary>], iteration_bounds = array<i64: 1>, scalar_prefetch = 0 : i64, scratch_operands = 0 : i64, tpu.core_type = #tpu.core_type<tc>, window_params = [{pipeline_mode = #tpu.pipeline_mode<synchronous>, transform_indices = @transform_0, window_bounds = array<i64: 32, 128>}, {pipeline_mode = #tpu.pipeline_mode<synchronous>, transform_indices = @transform_1, window_bounds = array<i64: 4, 384, 128>}, {pipeline_mode = #tpu.pipeline_mode<synchronous>, transform_indices = @transform_2, window_bounds = array<i64: 4, 128>}, {pipeline_mode = #tpu.pipeline_mode<synchronous>, transform_indices = @transform_3, window_bounds = array<i64: 4, 128>}, {pipeline_mode = #tpu.pipeline_mode<synchronous>, transform_indices = @transform_4, window_bounds = array<i64: 128, 128>}, {pipeline_mode = #tpu.pipeline_mode<synchronous>, transform_indices = @transform_5, window_bounds = array<i64: 32, 128>}]} {
    %c0 = arith.constant 0 : index
    %c0_0 = arith.constant 0 : index
    %0 = vector.load %arg3[%c0, %c0_0] : memref<4x128xf32, #tpu.memory_space<vmem>>, vector<4x128xf32>
    %c0_1 = arith.constant 0 : index
    %c0_2 = arith.constant 0 : index
    %1 = vector.load %arg4[%c0_1, %c0_2] : memref<4x128xf32, #tpu.memory_space<vmem>>, vector<4x128xf32>
    %c0_3 = arith.constant 0 : index
    %c0_4 = arith.constant 0 : index
    %2 = vector.load %arg5[%c0_3, %c0_4] : memref<128x128xf32, #tpu.memory_space<vmem>>, vector<128x128xf32>
    %3 = tpu.iota {dimensions = array<i32: 0>} : vector<32x128xi32>
    %c16_i32 = arith.constant 16 : i32
    %c0_i32 = arith.constant 0 : i32
    %4 = arith.cmpi eq, %c16_i32, %c0_i32 : i32
    %c1_i32 = arith.constant 1 : i32
    %5 = arith.select %4, %c1_i32, %c16_i32 : i32
    %6 = vector.broadcast %5 : i32 to vector<32x128xi32>
    %7 = arith.remsi %3, %6 : vector<32x128xi32>
    %c0_i32_5 = arith.constant 0 : i32
    %8 = vector.broadcast %c0_i32_5 : i32 to vector<32x128xi32>
    %9 = arith.cmpi ne, %7, %8 : vector<32x128xi32>
    %c0_i32_6 = arith.constant 0 : i32
    %10 = vector.broadcast %c0_i32_6 : i32 to vector<32x128xi32>
    %11 = arith.cmpi slt, %7, %10 : vector<32x128xi32>
    %c0_i32_7 = arith.constant 0 : i32
    %12 = arith.cmpi slt, %5, %c0_i32_7 : i32
    %13 = vector.broadcast %12 : i1 to vector<32x128xi1>
    %14 = vector.broadcast %13 : vector<32x128xi1> to vector<32x128xi1>
    %15 = arith.xori %11, %14 : vector<32x128xi1>
    %16 = arith.andi %15, %9 : vector<32x128xi1>
    %17 = vector.broadcast %5 : i32 to vector<32x128xi32>
    %18 = arith.addi %7, %17 : vector<32x128xi32>
    %19 = arith.select %16, %18, %7 : vector<32x128xi1>, vector<32x128xi32>
    %c1_i32_8 = arith.constant 1 : i32
    %20 = vector.broadcast %c1_i32_8 : i32 to vector<32x128xi32>
    %21 = arith.cmpi sge, %19, %20 : vector<32x128xi32>
    %c15_i32 = arith.constant 15 : i32
    %22 = vector.broadcast %c15_i32 : i32 to vector<32x128xi32>
    %23 = arith.cmpi slt, %19, %22 : vector<32x128xi32>
    %c0_9 = arith.constant 0 : index
    %c0_10 = arith.constant 0 : index
    %24 = vector.load %arg1[%c0_9, %c0_10] : memref<32x128xbf16, #tpu.memory_space<vmem>>, vector<32x128xbf16>
    %25 = arith.extf %24 : vector<32x128xbf16> to vector<32x128xf32>
    %c1_i32_11 = arith.constant 1 : i32
    %26 = tpu.dynamic_rotate %25 by %c1_i32_11 dim 0 : vector<32x128xf32>, i32 -> vector<32x128xf32>
    %cst = arith.constant 0.000000e+00 : f32
    %27 = vector.broadcast %cst : f32 to vector<32x128xf32>
    %28 = arith.select %21, %26, %27 : vector<32x128xi1>, vector<32x128xf32>
    %29 = arith.truncf %28 : vector<32x128xf32> to vector<32x128xbf16>
    %30 = arith.truncf %25 : vector<32x128xf32> to vector<32x128xbf16>
    %c31_i32 = arith.constant 31 : i32
    %31 = tpu.dynamic_rotate %25 by %c31_i32 dim 0 : vector<32x128xf32>, i32 -> vector<32x128xf32>
    %cst_12 = arith.constant 0.000000e+00 : f32
    %32 = vector.broadcast %cst_12 : f32 to vector<32x128xf32>
    %33 = arith.select %23, %31, %32 : vector<32x128xi1>, vector<32x128xf32>
    %34 = arith.truncf %33 : vector<32x128xf32> to vector<32x128xbf16>
    %35 = tpu.concatenate %29, %30, %34 in 1 : vector<32x128xbf16>, vector<32x128xbf16>, vector<32x128xbf16> -> vector<32x384xbf16>
    %c0_13 = arith.constant 0 : index
    %c0_14 = arith.constant 0 : index
    %c0_15 = arith.constant 0 : index
    %36 = vector.load %arg2[%c0_13, %c0_14, %c0_15] : memref<4x384x128xbf16, #tpu.memory_space<vmem>>, vector<1x384x128xbf16>
    %37 = vector.shape_cast %36 : vector<1x384x128xbf16> to vector<384x128xbf16>
    %cst_16 = arith.constant dense<0.000000e+00> : vector<32x128xf32>
    %38 = tpu.matmul %35, %37, %cst_16 {dimension_numbers = #tpu.dot_dimension_numbers<[1], [0], [0], [1], [0, 0, 1, 1], [], []>} : vector<32x384xbf16>, vector<384x128xbf16>, vector<32x128xf32> -> vector<32x128xf32>
    %cst_17 = arith.constant dense<0.000000e+00> : vector<128xf32>
    %39 = vector.multi_reduction <add>, %38, %cst_17 [0] : vector<32x128xf32> to vector<128xf32>
    %40 = vector.shape_cast %39 : vector<128xf32> to vector<1x128xf32>
    %cst_18 = arith.constant dense<0.000000e+00> : vector<1x128xf32>
    %41 = tpu.matmul %40, %2, %cst_18 {dimension_numbers = #tpu.dot_dimension_numbers<[1], [0], [0], [1], [0, 0, 1, 1], [], []>} : vector<1x128xf32>, vector<128x128xf32>, vector<1x128xf32> -> vector<1x128xf32>
    %cst_19 = arith.constant 0.001953125 : f32
    %42 = vector.broadcast %cst_19 : f32 to vector<1x128xf32>
    %43 = arith.mulf %41, %42 : vector<1x128xf32>
    %44 = vector.broadcast %43 : vector<1x128xf32> to vector<32x128xf32>
    %45 = arith.subf %38, %44 : vector<32x128xf32>
    %46 = arith.mulf %45, %45 : vector<32x128xf32>
    %cst_20 = arith.constant dense<0.000000e+00> : vector<128xf32>
    %47 = vector.multi_reduction <add>, %46, %cst_20 [0] : vector<32x128xf32> to vector<128xf32>
    %48 = vector.shape_cast %47 : vector<128xf32> to vector<1x128xf32>
    %cst_21 = arith.constant dense<0.000000e+00> : vector<1x128xf32>
    %49 = tpu.matmul %48, %2, %cst_21 {dimension_numbers = #tpu.dot_dimension_numbers<[1], [0], [0], [1], [0, 0, 1, 1], [], []>} : vector<1x128xf32>, vector<128x128xf32>, vector<1x128xf32> -> vector<1x128xf32>
    %cst_22 = arith.constant 0.001953125 : f32
    %50 = vector.broadcast %cst_22 : f32 to vector<1x128xf32>
    %51 = arith.mulf %49, %50 : vector<1x128xf32>
    %52 = vector.extract_strided_slice %0 {offsets = [0, 0], sizes = [1, 128], strides = [1, 1]} : vector<4x128xf32> to vector<1x128xf32>
    %cst_23 = arith.constant 9.99999974E-6 : f32
    %53 = vector.broadcast %cst_23 : f32 to vector<1x128xf32>
    %54 = arith.addf %51, %53 : vector<1x128xf32>
    %55 = math.rsqrt %54 : vector<1x128xf32>
    %56 = arith.mulf %52, %55 : vector<1x128xf32>
    %57 = vector.broadcast %56 : vector<1x128xf32> to vector<32x128xf32>
    %58 = arith.mulf %45, %57 : vector<32x128xf32>
    %59 = vector.extract_strided_slice %1 {offsets = [0, 0], sizes = [1, 128], strides = [1, 1]} : vector<4x128xf32> to vector<1x128xf32>
    %60 = vector.broadcast %59 : vector<1x128xf32> to vector<32x128xf32>
    %61 = arith.addf %58, %60 : vector<32x128xf32>
    %cst_24 = arith.constant 0.000000e+00 : f32
    %62 = vector.broadcast %cst_24 : f32 to vector<32x128xf32>
    %63 = arith.maximumf %61, %62 : vector<32x128xf32>
    %c1_i32_25 = arith.constant 1 : i32
    %64 = tpu.dynamic_rotate %63 by %c1_i32_25 dim 0 : vector<32x128xf32>, i32 -> vector<32x128xf32>
    %cst_26 = arith.constant 0.000000e+00 : f32
    %65 = vector.broadcast %cst_26 : f32 to vector<32x128xf32>
    %66 = arith.select %21, %64, %65 : vector<32x128xi1>, vector<32x128xf32>
    %67 = arith.truncf %66 : vector<32x128xf32> to vector<32x128xbf16>
    %68 = arith.truncf %63 : vector<32x128xf32> to vector<32x128xbf16>
    %c31_i32_27 = arith.constant 31 : i32
    %69 = tpu.dynamic_rotate %63 by %c31_i32_27 dim 0 : vector<32x128xf32>, i32 -> vector<32x128xf32>
    %cst_28 = arith.constant 0.000000e+00 : f32
    %70 = vector.broadcast %cst_28 : f32 to vector<32x128xf32>
    %71 = arith.select %23, %69, %70 : vector<32x128xi1>, vector<32x128xf32>
    %72 = arith.truncf %71 : vector<32x128xf32> to vector<32x128xbf16>
    %73 = tpu.concatenate %67, %68, %72 in 1 : vector<32x128xbf16>, vector<32x128xbf16>, vector<32x128xbf16> -> vector<32x384xbf16>
    %c1 = arith.constant 1 : index
    %c0_29 = arith.constant 0 : index
    %c0_30 = arith.constant 0 : index
    %74 = vector.load %arg2[%c1, %c0_29, %c0_30] : memref<4x384x128xbf16, #tpu.memory_space<vmem>>, vector<1x384x128xbf16>
    %75 = vector.shape_cast %74 : vector<1x384x128xbf16> to vector<384x128xbf16>
    %cst_31 = arith.constant dense<0.000000e+00> : vector<32x128xf32>
    %76 = tpu.matmul %73, %75, %cst_31 {dimension_numbers = #tpu.dot_dimension_numbers<[1], [0], [0], [1], [0, 0, 1, 1], [], []>} : vector<32x384xbf16>, vector<384x128xbf16>, vector<32x128xf32> -> vector<32x128xf32>
    %cst_32 = arith.constant dense<0.000000e+00> : vector<128xf32>
    %77 = vector.multi_reduction <add>, %76, %cst_32 [0] : vector<32x128xf32> to vector<128xf32>
    %78 = vector.shape_cast %77 : vector<128xf32> to vector<1x128xf32>
    %cst_33 = arith.constant dense<0.000000e+00> : vector<1x128xf32>
    %79 = tpu.matmul %78, %2, %cst_33 {dimension_numbers = #tpu.dot_dimension_numbers<[1], [0], [0], [1], [0, 0, 1, 1], [], []>} : vector<1x128xf32>, vector<128x128xf32>, vector<1x128xf32> -> vector<1x128xf32>
    %cst_34 = arith.constant 0.001953125 : f32
    %80 = vector.broadcast %cst_34 : f32 to vector<1x128xf32>
    %81 = arith.mulf %79, %80 : vector<1x128xf32>
    %82 = vector.broadcast %81 : vector<1x128xf32> to vector<32x128xf32>
    %83 = arith.subf %76, %82 : vector<32x128xf32>
    %84 = arith.mulf %83, %83 : vector<32x128xf32>
    %cst_35 = arith.constant dense<0.000000e+00> : vector<128xf32>
    %85 = vector.multi_reduction <add>, %84, %cst_35 [0] : vector<32x128xf32> to vector<128xf32>
    %86 = vector.shape_cast %85 : vector<128xf32> to vector<1x128xf32>
    %cst_36 = arith.constant dense<0.000000e+00> : vector<1x128xf32>
    %87 = tpu.matmul %86, %2, %cst_36 {dimension_numbers = #tpu.dot_dimension_numbers<[1], [0], [0], [1], [0, 0, 1, 1], [], []>} : vector<1x128xf32>, vector<128x128xf32>, vector<1x128xf32> -> vector<1x128xf32>
    %cst_37 = arith.constant 0.001953125 : f32
    %88 = vector.broadcast %cst_37 : f32 to vector<1x128xf32>
    %89 = arith.mulf %87, %88 : vector<1x128xf32>
    %90 = vector.extract_strided_slice %0 {offsets = [1, 0], sizes = [1, 128], strides = [1, 1]} : vector<4x128xf32> to vector<1x128xf32>
    %cst_38 = arith.constant 9.99999974E-6 : f32
    %91 = vector.broadcast %cst_38 : f32 to vector<1x128xf32>
    %92 = arith.addf %89, %91 : vector<1x128xf32>
    %93 = math.rsqrt %92 : vector<1x128xf32>
    %94 = arith.mulf %90, %93 : vector<1x128xf32>
    %95 = vector.broadcast %94 : vector<1x128xf32> to vector<32x128xf32>
    %96 = arith.mulf %83, %95 : vector<32x128xf32>
    %97 = vector.extract_strided_slice %1 {offsets = [1, 0], sizes = [1, 128], strides = [1, 1]} : vector<4x128xf32> to vector<1x128xf32>
    %98 = vector.broadcast %97 : vector<1x128xf32> to vector<32x128xf32>
    %99 = arith.addf %96, %98 : vector<32x128xf32>
    %cst_39 = arith.constant 0.000000e+00 : f32
    %100 = vector.broadcast %cst_39 : f32 to vector<32x128xf32>
    %101 = arith.maximumf %99, %100 : vector<32x128xf32>
    %c1_i32_40 = arith.constant 1 : i32
    %102 = tpu.dynamic_rotate %101 by %c1_i32_40 dim 0 : vector<32x128xf32>, i32 -> vector<32x128xf32>
    %cst_41 = arith.constant 0.000000e+00 : f32
    %103 = vector.broadcast %cst_41 : f32 to vector<32x128xf32>
    %104 = arith.select %21, %102, %103 : vector<32x128xi1>, vector<32x128xf32>
    %105 = arith.truncf %104 : vector<32x128xf32> to vector<32x128xbf16>
    %106 = arith.truncf %101 : vector<32x128xf32> to vector<32x128xbf16>
    %c31_i32_42 = arith.constant 31 : i32
    %107 = tpu.dynamic_rotate %101 by %c31_i32_42 dim 0 : vector<32x128xf32>, i32 -> vector<32x128xf32>
    %cst_43 = arith.constant 0.000000e+00 : f32
    %108 = vector.broadcast %cst_43 : f32 to vector<32x128xf32>
    %109 = arith.select %23, %107, %108 : vector<32x128xi1>, vector<32x128xf32>
    %110 = arith.truncf %109 : vector<32x128xf32> to vector<32x128xbf16>
    %111 = tpu.concatenate %105, %106, %110 in 1 : vector<32x128xbf16>, vector<32x128xbf16>, vector<32x128xbf16> -> vector<32x384xbf16>
    %c2 = arith.constant 2 : index
    %c0_44 = arith.constant 0 : index
    %c0_45 = arith.constant 0 : index
    %112 = vector.load %arg2[%c2, %c0_44, %c0_45] : memref<4x384x128xbf16, #tpu.memory_space<vmem>>, vector<1x384x128xbf16>
    %113 = vector.shape_cast %112 : vector<1x384x128xbf16> to vector<384x128xbf16>
    %cst_46 = arith.constant dense<0.000000e+00> : vector<32x128xf32>
    %114 = tpu.matmul %111, %113, %cst_46 {dimension_numbers = #tpu.dot_dimension_numbers<[1], [0], [0], [1], [0, 0, 1, 1], [], []>} : vector<32x384xbf16>, vector<384x128xbf16>, vector<32x128xf32> -> vector<32x128xf32>
    %cst_47 = arith.constant dense<0.000000e+00> : vector<128xf32>
    %115 = vector.multi_reduction <add>, %114, %cst_47 [0] : vector<32x128xf32> to vector<128xf32>
    %116 = vector.shape_cast %115 : vector<128xf32> to vector<1x128xf32>
    %cst_48 = arith.constant dense<0.000000e+00> : vector<1x128xf32>
    %117 = tpu.matmul %116, %2, %cst_48 {dimension_numbers = #tpu.dot_dimension_numbers<[1], [0], [0], [1], [0, 0, 1, 1], [], []>} : vector<1x128xf32>, vector<128x128xf32>, vector<1x128xf32> -> vector<1x128xf32>
    %cst_49 = arith.constant 0.001953125 : f32
    %118 = vector.broadcast %cst_49 : f32 to vector<1x128xf32>
    %119 = arith.mulf %117, %118 : vector<1x128xf32>
    %120 = vector.broadcast %119 : vector<1x128xf32> to vector<32x128xf32>
    %121 = arith.subf %114, %120 : vector<32x128xf32>
    %122 = arith.mulf %121, %121 : vector<32x128xf32>
    %cst_50 = arith.constant dense<0.000000e+00> : vector<128xf32>
    %123 = vector.multi_reduction <add>, %122, %cst_50 [0] : vector<32x128xf32> to vector<128xf32>
    %124 = vector.shape_cast %123 : vector<128xf32> to vector<1x128xf32>
    %cst_51 = arith.constant dense<0.000000e+00> : vector<1x128xf32>
    %125 = tpu.matmul %124, %2, %cst_51 {dimension_numbers = #tpu.dot_dimension_numbers<[1], [0], [0], [1], [0, 0, 1, 1], [], []>} : vector<1x128xf32>, vector<128x128xf32>, vector<1x128xf32> -> vector<1x128xf32>
    %cst_52 = arith.constant 0.001953125 : f32
    %126 = vector.broadcast %cst_52 : f32 to vector<1x128xf32>
    %127 = arith.mulf %125, %126 : vector<1x128xf32>
    %128 = vector.extract_strided_slice %0 {offsets = [2, 0], sizes = [1, 128], strides = [1, 1]} : vector<4x128xf32> to vector<1x128xf32>
    %cst_53 = arith.constant 9.99999974E-6 : f32
    %129 = vector.broadcast %cst_53 : f32 to vector<1x128xf32>
    %130 = arith.addf %127, %129 : vector<1x128xf32>
    %131 = math.rsqrt %130 : vector<1x128xf32>
    %132 = arith.mulf %128, %131 : vector<1x128xf32>
    %133 = vector.broadcast %132 : vector<1x128xf32> to vector<32x128xf32>
    %134 = arith.mulf %121, %133 : vector<32x128xf32>
    %135 = vector.extract_strided_slice %1 {offsets = [2, 0], sizes = [1, 128], strides = [1, 1]} : vector<4x128xf32> to vector<1x128xf32>
    %136 = vector.broadcast %135 : vector<1x128xf32> to vector<32x128xf32>
    %137 = arith.addf %134, %136 : vector<32x128xf32>
    %cst_54 = arith.constant 0.000000e+00 : f32
    %138 = vector.broadcast %cst_54 : f32 to vector<32x128xf32>
    %139 = arith.maximumf %137, %138 : vector<32x128xf32>
    %c1_i32_55 = arith.constant 1 : i32
    %140 = tpu.dynamic_rotate %139 by %c1_i32_55 dim 0 : vector<32x128xf32>, i32 -> vector<32x128xf32>
    %cst_56 = arith.constant 0.000000e+00 : f32
    %141 = vector.broadcast %cst_56 : f32 to vector<32x128xf32>
    %142 = arith.select %21, %140, %141 : vector<32x128xi1>, vector<32x128xf32>
    %143 = arith.truncf %142 : vector<32x128xf32> to vector<32x128xbf16>
    %144 = arith.truncf %139 : vector<32x128xf32> to vector<32x128xbf16>
    %c31_i32_57 = arith.constant 31 : i32
    %145 = tpu.dynamic_rotate %139 by %c31_i32_57 dim 0 : vector<32x128xf32>, i32 -> vector<32x128xf32>
    %cst_58 = arith.constant 0.000000e+00 : f32
    %146 = vector.broadcast %cst_58 : f32 to vector<32x128xf32>
    %147 = arith.select %23, %145, %146 : vector<32x128xi1>, vector<32x128xf32>
    %148 = arith.truncf %147 : vector<32x128xf32> to vector<32x128xbf16>
    %149 = tpu.concatenate %143, %144, %148 in 1 : vector<32x128xbf16>, vector<32x128xbf16>, vector<32x128xbf16> -> vector<32x384xbf16>
    %c3 = arith.constant 3 : index
    %c0_59 = arith.constant 0 : index
    %c0_60 = arith.constant 0 : index
    %150 = vector.load %arg2[%c3, %c0_59, %c0_60] : memref<4x384x128xbf16, #tpu.memory_space<vmem>>, vector<1x384x128xbf16>
    %151 = vector.shape_cast %150 : vector<1x384x128xbf16> to vector<384x128xbf16>
    %cst_61 = arith.constant dense<0.000000e+00> : vector<32x128xf32>
    %152 = tpu.matmul %149, %151, %cst_61 {dimension_numbers = #tpu.dot_dimension_numbers<[1], [0], [0], [1], [0, 0, 1, 1], [], []>} : vector<32x384xbf16>, vector<384x128xbf16>, vector<32x128xf32> -> vector<32x128xf32>
    %cst_62 = arith.constant dense<0.000000e+00> : vector<128xf32>
    %153 = vector.multi_reduction <add>, %152, %cst_62 [0] : vector<32x128xf32> to vector<128xf32>
    %154 = vector.shape_cast %153 : vector<128xf32> to vector<1x128xf32>
    %cst_63 = arith.constant dense<0.000000e+00> : vector<1x128xf32>
    %155 = tpu.matmul %154, %2, %cst_63 {dimension_numbers = #tpu.dot_dimension_numbers<[1], [0], [0], [1], [0, 0, 1, 1], [], []>} : vector<1x128xf32>, vector<128x128xf32>, vector<1x128xf32> -> vector<1x128xf32>
    %cst_64 = arith.constant 0.001953125 : f32
    %156 = vector.broadcast %cst_64 : f32 to vector<1x128xf32>
    %157 = arith.mulf %155, %156 : vector<1x128xf32>
    %158 = vector.broadcast %157 : vector<1x128xf32> to vector<32x128xf32>
    %159 = arith.subf %152, %158 : vector<32x128xf32>
    %160 = arith.mulf %159, %159 : vector<32x128xf32>
    %cst_65 = arith.constant dense<0.000000e+00> : vector<128xf32>
    %161 = vector.multi_reduction <add>, %160, %cst_65 [0] : vector<32x128xf32> to vector<128xf32>
    %162 = vector.shape_cast %161 : vector<128xf32> to vector<1x128xf32>
    %cst_66 = arith.constant dense<0.000000e+00> : vector<1x128xf32>
    %163 = tpu.matmul %162, %2, %cst_66 {dimension_numbers = #tpu.dot_dimension_numbers<[1], [0], [0], [1], [0, 0, 1, 1], [], []>} : vector<1x128xf32>, vector<128x128xf32>, vector<1x128xf32> -> vector<1x128xf32>
    %cst_67 = arith.constant 0.001953125 : f32
    %164 = vector.broadcast %cst_67 : f32 to vector<1x128xf32>
    %165 = arith.mulf %163, %164 : vector<1x128xf32>
    %166 = vector.extract_strided_slice %0 {offsets = [3, 0], sizes = [1, 128], strides = [1, 1]} : vector<4x128xf32> to vector<1x128xf32>
    %cst_68 = arith.constant 9.99999974E-6 : f32
    %167 = vector.broadcast %cst_68 : f32 to vector<1x128xf32>
    %168 = arith.addf %165, %167 : vector<1x128xf32>
    %169 = math.rsqrt %168 : vector<1x128xf32>
    %170 = arith.mulf %166, %169 : vector<1x128xf32>
    %171 = vector.broadcast %170 : vector<1x128xf32> to vector<32x128xf32>
    %172 = arith.mulf %159, %171 : vector<32x128xf32>
    %173 = vector.extract_strided_slice %1 {offsets = [3, 0], sizes = [1, 128], strides = [1, 1]} : vector<4x128xf32> to vector<1x128xf32>
    %174 = vector.broadcast %173 : vector<1x128xf32> to vector<32x128xf32>
    %175 = arith.addf %172, %174 : vector<32x128xf32>
    %cst_69 = arith.constant 0.000000e+00 : f32
    %176 = vector.broadcast %cst_69 : f32 to vector<32x128xf32>
    %177 = arith.maximumf %175, %176 : vector<32x128xf32>
    %c0_70 = arith.constant 0 : index
    %c0_71 = arith.constant 0 : index
    %178 = vector.load %arg6[%c0_70, %c0_71] : memref<32x128xf32, #tpu.memory_space<vmem>>, vector<32x128xf32>
    tpu.vector_store %arg6[%c0_70, %c0_71], %177 {strides = array<i32>} : memref<32x128xf32, #tpu.memory_space<vmem>>, vector<32x128xf32>,
    return
  }
  func.func @transform_0(%arg0: i32) -> (i32, i32) {
    %c0_i32 = arith.constant 0 : i32
    %c0_i32_0 = arith.constant 0 : i32
    %c0_i32_1 = arith.constant 0 : i32
    return %c0_i32, %c0_i32_0 : i32, i32
  }
  func.func @transform_1(%arg0: i32) -> (i32, i32, i32) {
    %c0_i32 = arith.constant 0 : i32
    %c0_i32_0 = arith.constant 0 : i32
    %c0_i32_1 = arith.constant 0 : i32
    %c0_i32_2 = arith.constant 0 : i32
    return %c0_i32, %c0_i32_0, %c0_i32_1 : i32, i32, i32
  }
  func.func @transform_2(%arg0: i32) -> (i32, i32) {
    %c0_i32 = arith.constant 0 : i32
    %c0_i32_0 = arith.constant 0 : i32
    %c0_i32_1 = arith.constant 0 : i32
    return %c0_i32, %c0_i32_0 : i32, i32
  }
  func.func @transform_3(%arg0: i32) -> (i32, i32) {
    %c0_i32 = arith.constant 0 : i32
    %c0_i32_0 = arith.constant 0 : i32
    %c0_i32_1 = arith.constant 0 : i32
    return %c0_i32, %c0_i32_0 : i32, i32
  }
  func.func @transform_4(%arg0: i32) -> (i32, i32) {
    %c0_i32 = arith.constant 0 : i32
    %c0_i32_0 = arith.constant 0 : i32
    %c0_i32_1 = arith.constant 0 : i32
    return %c0_i32, %c0_i32_0 : i32, i32
  }
  func.func @transform_5(%arg0: i32) -> (i32, i32) {
    %c0_i32 = arith.constant 0 : i32
    %c0_i32_0 = arith.constant 0 : i32
    %c0_i32_1 = arith.constant 0 : i32
    return %c0_i32, %c0_i32_0 : i32, i32
  }
}

</mosaic_0001>

<llo_original>
// kernel: tile.67
$region0: #{tile.67}
  #allocation0 [shape = 's32[1]{0}', space=sflag, size = 0x4, scoped, tag = 'scoped memory for tile.67']
  %s0 = inlined_call_operand.vmem [shape: f32[8], index: 0, kind: input, shape index: {}]
  %s1 = inlined_call_operand.vmem [shape: f32[16,8], index: 1, kind: output, shape index: {}]
  // Predicated region
  $region2: #{tile.67} parent=0 // pred_check
    _
  $region3: #{tile.67} parent=0 // pred_check_branch
    %3 = sbr.rel (0) target = $region5
  $region4: #{tile.67} parent=0 // pred_region
    _
  $region5: #{tile.67} parent=0 // pred_fallthru
    _
  %v4 = vld [vmem:[%s0] ss:$0 sm:$0xff]
  %5 = vst [vmem:[%s1] sm:$0xff] %v4
  %s6 = scalar_lea.vmem %s1, 8
  %7 = vst [vmem:[%s6] sm:$0xff] %v4

// kernel: tile.75
$region0: #{tile.75}
  %s0 = inlined_call_operand.vmem [shape: f32[16,8], index: 0, kind: input, shape index: {}]
  %s1 = inlined_call_operand.vmem [shape: f32[1,128], index: 1, kind: output, shape index: {}]
  $region1: #{tile.75} parent=0
    #allocation0 [shape = 'u8[4096]{0}', space=vmem, size = 0x1000, scoped, tag = 'scoped mem for output reshape']
    %v2 = vld [vmem:[%s0] sm:$0x1]
    %vm3 = vcmask 64512
    %4 = vst.msk [vmem:[#allocation0] sm:$0x1] %vm3, %v2
    %s5 = scalar_lea.vmem %s0, 15
    %v6 = vld [vmem:[%s5] sm:$0x1]
    %7 = vrot.lane.b32.xlu0 %v6, 120
    %v8 = vpop.permute.xlu0 %7
    %vm9 = vcmask 1048512
    %10 = vst.msk [vmem:[#allocation0] sm:$0x1] %vm9, %v8
    %s11 = scalar_lea.vmem %s0, 14
    %v12 = vld [vmem:[%s11] sm:$0x1]
    %13 = vrot.lane.b32.xlu0 %v12, 112
    %v14 = vpop.permute.xlu0 %13
    %vm15 = vcmask 982912
    %16 = vst.msk [vmem:[#allocation0] sm:$0x1] %vm15, %v14
    %s17 = scalar_lea.vmem %s0, 13
    %v18 = vld [vmem:[%s17] sm:$0x1]
    %19 = vrot.lane.b32.xlu0 %v18, 104
    %v20 = vpop.permute.xlu0 %19
    %vm21 = vcmask 917312
    %22 = vst.msk [vmem:[#allocation0] sm:$0x1] %vm21, %v20
    %s23 = scalar_lea.vmem %s0, 12
    %v24 = vld [vmem:[%s23] sm:$0x1]
    %25 = vrot.lane.b32.xlu0 %v24, 96
    %v26 = vpop.permute.xlu0 %25
    %vm27 = vcmask 851712
    %28 = vst.msk [vmem:[#allocation0] sm:$0x1] %vm27, %v26
    %s29 = scalar_lea.vmem %s0, 11
    %v30 = vld [vmem:[%s29] sm:$0x1]
    %31 = vrot.lane.b32.xlu0 %v30, 88
    %v32 = vpop.permute.xlu0 %31
    %vm33 = vcmask 786112
    %34 = vst.msk [vmem:[#allocation0] sm:$0x1] %vm33, %v32
    %s35 = scalar_lea.vmem %s0, 10
    %v36 = vld [vmem:[%s35] sm:$0x1]
    %37 = vrot.lane.b32.xlu0 %v36, 80
    %v38 = vpop.permute.xlu0 %37
    %vm39 = vcmask 720512
    %40 = vst.msk [vmem:[#allocation0] sm:$0x1] %vm39, %v38
    %s41 = scalar_lea.vmem %s0, 9
    %v42 = vld [vmem:[%s41] sm:$0x1]
    %43 = vrot.lane.b32.xlu0 %v42, 72
    %v44 = vpop.permute.xlu0 %43
    %vm45 = vcmask 654912
    %46 = vst.msk [vmem:[#allocation0] sm:$0x1] %vm45, %v44
    %s47 = scalar_lea.vmem %s0, 8
    %v48 = vld [vmem:[%s47] sm:$0x1]
    %49 = vrot.lane.b32.xlu0 %v48, 64
    %v50 = vpop.permute.xlu0 %49
    %vm51 = vcmask 589312
    %52 = vst.msk [vmem:[#allocation0] sm:$0x1] %vm51, %v50
    %s53 = scalar_lea.vmem %s0, 7
    %v54 = vld [vmem:[%s53] sm:$0x1]
    %55 = vrot.lane.b32.xlu0 %v54, 56
    %v56 = vpop.permute.xlu0 %55
    %vm57 = vcmask 523712
    %58 = vst.msk [vmem:[#allocation0] sm:$0x1] %vm57, %v56
    %s59 = scalar_lea.vmem %s0, 6
    %v60 = vld [vmem:[%s59] sm:$0x1]
    %61 = vrot.lane.b32.xlu0 %v60, 48
    %v62 = vpop.permute.xlu0 %61
    %vm63 = vcmask 458112
    %64 = vst.msk [vmem:[#allocation0] sm:$0x1] %vm63, %v62
    %s65 = scalar_lea.vmem %s0, 5
    %v66 = vld [vmem:[%s65] sm:$0x1]
    %67 = vrot.lane.b32.xlu0 %v66, 40
    %v68 = vpop.permute.xlu0 %67
    %vm69 = vcmask 392512
    %70 = vst.msk [vmem:[#allocation0] sm:$0x1] %vm69, %v68
    %s71 = scalar_lea.vmem %s0, 4
    %v72 = vld [vmem:[%s71] sm:$0x1]
    %73 = vrot.lane.b32.xlu0 %v72, 32
    %v74 = vpop.permute.xlu0 %73
    %vm75 = vcmask 326912
    %76 = vst.msk [vmem:[#allocation0] sm:$0x1] %vm75, %v74
    %s77 = scalar_lea.vmem %s0, 3
    %v78 = vld [vmem:[%s77] sm:$0x1]
    %79 = vrot.lane.b32.xlu0 %v78, 24
    %v80 = vpop.permute.xlu0 %79
    %vm81 = vcmask 261312
    %82 = vst.msk [vmem:[#allocation0] sm:$0x1] %vm81, %v80
    %s83 = scalar_lea.vmem %s0, 2
    %v84 = vld [vmem:[%s83] sm:$0x1]
    %85 = vrot.lane.b32.xlu0 %v84, 16
    %v86 = vpop.permute.xlu0 %85
    %vm87 = vcmask 195712
    %88 = vst.msk [vmem:[#allocation0] sm:$0x1] %vm87, %v86
    %s89 = scalar_lea.vmem %s0, 1
    %v90 = vld [vmem:[%s89] sm:$0x1]
    %91 = vrot.lane.b32.xlu0 %v90, 8
    %v92 = vpop.permute.xlu0 %91
    %vm93 = vcmask 130112
    %94 = vst.msk [vmem:[#allocation0] sm:$0x1] %vm93, %v92
    %s96 = ssub.s32 2, 1
    %v97 = vld [vmem:[#allocation0] sm:%s96]
    %s99 = ssub.s32 2, 1
    %100 = vst [vmem:[%s1] sm:%s99] %v97

// kernel: _forward.1
$region0: #{_forward.1}
  #allocation0 [shape = 'u32[]', space=smem, size = 0x4, offset = 0x4, fixed_abs, tag = 'smem constant byte address 0x4 - core index']
  #allocation1 [shape = 'u32[72,128]{1,0:T(1,128)}', space=vmem, size = 0x9000, scoped, tag = 'internal scratch']
  %s0 = inlined_call_operand.vmem [shape: bf16[32,128], index: 0, kind: input, shape index: {}]
  %s1 = inlined_call_operand.vmem [shape: bf16[4,384,128], index: 1, kind: input, shape index: {}]
  %s2 = inlined_call_operand.vmem [shape: f32[4,128], index: 2, kind: input, shape index: {}]
  %s3 = inlined_call_operand.vmem [shape: f32[4,128], index: 3, kind: input, shape index: {}]
  %s4 = inlined_call_operand.vmem [shape: f32[128,128], index: 4, kind: input, shape index: {}]
  %s5 = inlined_call_operand.vmem [shape: f32[32,128], index: 5, kind: output, shape index: {}]
  %s6 = sld [smem:[#allocation0]]
  $region30: #{_forward.1} parent=0
    _
  %s8 = ssub.s32 1, %s6
  %s9 = scalar_select 0, %s8, %s6
  // Predicated region
  $region2: #{_forward.1} parent=0 // pred_check
    _
  $region3: #{_forward.1} parent=0 // pred_check_branch
    %11 = sbr.rel (0) target = $region5
  $region4: #{_forward.1} parent=0 // pred_region
    _
  $region5: #{_forward.1} parent=0 // pred_fallthru
    _
  // Predicated region
  $region6: #{_forward.1} parent=0 // pred_check
    _
  $region7: #{_forward.1} parent=0 // pred_check_branch
    %13 = sbr.rel (0) target = $region9
  $region8: #{_forward.1} parent=0 // pred_region
    _
  $region9: #{_forward.1} parent=0 // pred_fallthru
    _
  // Predicated region
  $region10: #{_forward.1} parent=0 // pred_check
    _
  $region11: #{_forward.1} parent=0 // pred_check_branch
    %15 = sbr.rel (0) target = $region13
  $region12: #{_forward.1} parent=0 // pred_region
    _
  $region13: #{_forward.1} parent=0 // pred_fallthru
    _
  // Predicated region
  $region14: #{_forward.1} parent=0 // pred_check
    _
  $region15: #{_forward.1} parent=0 // pred_check_branch
    %17 = sbr.rel (0) target = $region17
  $region16: #{_forward.1} parent=0 // pred_region
    _
  $region17: #{_forward.1} parent=0 // pred_fallthru
    _
  // Predicated region
  $region18: #{_forward.1} parent=0 // pred_check
    _
  $region19: #{_forward.1} parent=0 // pred_check_branch
    %19 = sbr.rel (0) target = $region21
  $region20: #{_forward.1} parent=0 // pred_region
    _
  $region21: #{_forward.1} parent=0 // pred_fallthru
    _
  %v20 = vld [vmem:[%s2] sm:$0xf]
  %v21 = vld [vmem:[%s3] sm:$0xf]
  %v22 = vld [vmem:[%s4] sm:$0xff]
  %v23 = vld [vmem:[%s4 + $0x8] sm:$0xff]
  %v24 = vld [vmem:[%s4 + $0x10] sm:$0xff]
  %v25 = vld [vmem:[%s4 + $0x18] sm:$0xff]
  %v26 = vld [vmem:[%s4 + $0x20] sm:$0xff]
  %v27 = vld [vmem:[%s4 + $0x28] sm:$0xff]
  %v28 = vld [vmem:[%s4 + $0x30] sm:$0xff]
  %v29 = vld [vmem:[%s4 + $0x38] sm:$0xff]
  %v30 = vld [vmem:[%s4 + $0x40] sm:$0xff]
  %v31 = vld [vmem:[%s4 + $0x48] sm:$0xff]
  %v32 = vld [vmem:[%s4 + $0x50] sm:$0xff]
  %v33 = vld [vmem:[%s4 + $0x58] sm:$0xff]
  %v34 = vld [vmem:[%s4 + $0x60] sm:$0xff]
  %v35 = vld [vmem:[%s4 + $0x68] sm:$0xff]
  %v36 = vld [vmem:[%s4 + $0x70] sm:$0xff]
  %v37 = vld [vmem:[%s4 + $0x78] sm:$0xff]
  %v38 = vlaneseq
  %v39 = vshrl.u32 %v38, 7
  %v40 = vadd.s32 %v39, 8
  %v41 = vadd.s32 %v39, 16
  %v42 = vadd.s32 %v39, 24
  %vm43 = vcmp.lt.s32.totalorder %v39, 0
  %v44 = vsub.s32 0, %v39
  %v45 = vsel %vm43, %v44, %v39
  %v46 = vshrl.u32 %v45, 4
  %v47 = vand.u32 %v45, 15
  %v48 = vsub.s32 0, %v47
  %v49 = vsel %vm43, %v48, %v47
  %vm50 = vcmp.lt.s32.totalorder %v40, 0
  %v51 = vsub.s32 0, %v40
  %v52 = vsel %vm50, %v51, %v40
  %v53 = vshrl.u32 %v52, 4
  %v54 = vand.u32 %v52, 15
  %v55 = vsub.s32 0, %v54
  %v56 = vsel %vm50, %v55, %v54
  %vm57 = vcmp.lt.s32.totalorder %v41, 0
  %v58 = vsub.s32 0, %v41
  %v59 = vsel %vm57, %v58, %v41
  %v60 = vshrl.u32 %v59, 4
  %v61 = vand.u32 %v59, 15
  %v62 = vsub.s32 0, %v61
  %v63 = vsel %vm57, %v62, %v61
  %vm64 = vcmp.lt.s32.totalorder %v42, 0
  %v65 = vsub.s32 0, %v42
  %v66 = vsel %vm64, %v65, %v42
  %v67 = vshrl.u32 %v66, 4
  %v68 = vand.u32 %v66, 15
  %v69 = vsub.s32 0, %v68
  %v70 = vsel %vm64, %v69, %v68
  %vm71 = vcmp.ne.s32.totalorder %v49, 0
  %vm72 = vcmp.ne.s32.totalorder %v56, 0
  %vm73 = vcmp.ne.s32.totalorder %v63, 0
  %vm74 = vcmp.ne.s32.totalorder %v70, 0
  %vm75 = vcmp.lt.s32.totalorder %v49, 0
  %vm76 = vcmp.lt.s32.totalorder %v56, 0
  %vm77 = vcmp.lt.s32.totalorder %v63, 0
  %vm78 = vcmp.lt.s32.totalorder %v70, 0
  %vm79 = vmand %vm75, %vm71
  %vm80 = vmand %vm76, %vm72
  %vm81 = vmand %vm77, %vm73
  %vm82 = vmand %vm78, %vm74
  %v83 = vadd.s32 %v49, 16
  %v84 = vadd.s32 %v56, 16
  %v85 = vadd.s32 %v63, 16
  %v86 = vadd.s32 %v70, 16
  %v87 = vsel %vm79, %v83, %v49
  %v88 = vsel %vm80, %v84, %v56
  %v89 = vsel %vm81, %v85, %v63
  %v90 = vsel %vm82, %v86, %v70
  %vm91 = vcmp.ge.s32.totalorder %v87, 1
  %vm92 = vcmp.ge.s32.totalorder %v88, 1
  %vm93 = vcmp.ge.s32.totalorder %v89, 1
  %vm94 = vcmp.ge.s32.totalorder %v90, 1
  %vm95 = vcmp.lt.s32.totalorder %v87, 15
  %vm96 = vcmp.lt.s32.totalorder %v88, 15
  %vm97 = vcmp.lt.s32.totalorder %v89, 15
  %vm98 = vcmp.lt.s32.totalorder %v90, 15
  %v99 = vld [vmem:[%s0] sm:$0xf]
  %v100 = vld [vmem:[%s0 + $0x4] sm:$0xf]
  %v101 = vld [vmem:[%s0 + $0x8] sm:$0xf]
  %v102 = vld [vmem:[%s0 + $0xc] sm:$0xf]
  %v103 = vunpack.c.l.bf16 %v99
  %v104 = vunpack.c.l.bf16 %v100
  %v105 = vunpack.c.l.bf16 %v101
  %v106 = vunpack.c.l.bf16 %v102
  %v107 = vrot.slane %v103, 7
  %v108 = vrot.slane %v104, 7
  %v109 = vrot.slane %v105, 7
  %v110 = vrot.slane %v106, 7
  %vm111 = vcmp.lt.s32.totalorder %v39, 1
  %v112 = vsel %vm111, %v109, %v110
  %v113 = vsel %vm111, %v108, %v109
  %v114 = vsel %vm111, %v107, %v108
  %v115 = vsel %vm111, %v110, %v107
  %v116 = vsel %vm91, %v115, 0.0
  %v117 = vsel %vm92, %v114, 0.0
  %v118 = vsel %vm93, %v113, 0.0
  %v119 = vsel %vm94, %v112, 0.0
  %v120 = vpack.c.bf16 %v116, %v116
  %v121 = vpack.c.bf16 %v117, %v117
  %v122 = vpack.c.bf16 %v118, %v118
  %v123 = vpack.c.bf16 %v119, %v119
  %v124 = vrot.slane %v103, 1
  %v125 = vrot.slane %v104, 1
  %v126 = vrot.slane %v105, 1
  %v127 = vrot.slane %v106, 1
  %vm128 = vcmp.lt.s32.totalorder %v39, 7
  %v129 = vsel %vm128, %v126, %v127
  %v130 = vsel %vm128, %v125, %v126
  %v131 = vsel %vm128, %v124, %v125
  %v132 = vsel %vm128, %v127, %v124
  %v133 = vsel %vm95, %v131, 0.0
  %v134 = vsel %vm96, %v130, 0.0
  %v135 = vsel %vm97, %v129, 0.0
  %v136 = vsel %vm98, %v132, 0.0
  %v137 = vpack.c.bf16 %v133, %v133
  %v138 = vpack.c.bf16 %v134, %v134
  %v139 = vpack.c.bf16 %v135, %v135
  %v140 = vpack.c.bf16 %v136, %v136
  %v145 = vunpack.c.l.b16 %v120
  %v146 = vunpack.c.l.b16 %v121
  %v147 = vunpack.c.l.b16 %v122
  %v148 = vunpack.c.l.b16 %v123
  %v149 = vpack.c.b16 %v146, %v145
  %v150 = vpack.c.b16 %v148, %v147
  %v157 = vunpack.c.l.b16 %v99
  %v158 = vunpack.c.l.b16 %v100
  %v159 = vunpack.c.l.b16 %v101
  %v160 = vunpack.c.l.b16 %v102
  %v161 = vpack.c.b16 %v158, %v157
  %v162 = vpack.c.b16 %v160, %v159
  %v169 = vunpack.c.l.b16 %v137
  %v170 = vunpack.c.l.b16 %v138
  %v171 = vunpack.c.l.b16 %v139
  %v172 = vunpack.c.l.b16 %v140
  %v173 = vpack.c.b16 %v170, %v169
  %v174 = vpack.c.b16 %v172, %v171
  %v177 = vld [vmem:[%s1] sm:$0xf]
  %v178 = vld [vmem:[%s1 + $0x4] sm:$0xf]
  %v179 = vld [vmem:[%s1 + $0x8] sm:$0xf]
  %v180 = vld [vmem:[%s1 + $0xc] sm:$0xf]
  %v181 = vld [vmem:[%s1 + $0x10] sm:$0xf]
  %v182 = vld [vmem:[%s1 + $0x14] sm:$0xf]
  %v183 = vld [vmem:[%s1 + $0x18] sm:$0xf]
  %v184 = vld [vmem:[%s1 + $0x1c] sm:$0xf]
  %v185 = vld [vmem:[%s1 + $0x20] sm:$0xf]
  %v186 = vld [vmem:[%s1 + $0x24] sm:$0xf]
  %v187 = vld [vmem:[%s1 + $0x28] sm:$0xf]
  %v188 = vld [vmem:[%s1 + $0x2c] sm:$0xf]
  %v189 = vld [vmem:[%s1 + $0x30] sm:$0xf]
  %v190 = vld [vmem:[%s1 + $0x34] sm:$0xf]
  %v191 = vld [vmem:[%s1 + $0x38] sm:$0xf]
  %v192 = vld [vmem:[%s1 + $0x3c] sm:$0xf]
  %v193 = vld [vmem:[%s1 + $0x40] sm:$0xf]
  %v194 = vld [vmem:[%s1 + $0x44] sm:$0xf]
  %v195 = vld [vmem:[%s1 + $0x48] sm:$0xf]
  %v196 = vld [vmem:[%s1 + $0x4c] sm:$0xf]
  %v197 = vld [vmem:[%s1 + $0x50] sm:$0xf]
  %v198 = vld [vmem:[%s1 + $0x54] sm:$0xf]
  %v199 = vld [vmem:[%s1 + $0x58] sm:$0xf]
  %v200 = vld [vmem:[%s1 + $0x5c] sm:$0xf]
  %v201 = vld [vmem:[%s1 + $0x60] sm:$0xf]
  %v202 = vld [vmem:[%s1 + $0x64] sm:$0xf]
  %v203 = vld [vmem:[%s1 + $0x68] sm:$0xf]
  %v204 = vld [vmem:[%s1 + $0x6c] sm:$0xf]
  %v205 = vld [vmem:[%s1 + $0x70] sm:$0xf]
  %v206 = vld [vmem:[%s1 + $0x74] sm:$0xf]
  %v207 = vld [vmem:[%s1 + $0x78] sm:$0xf]
  %v208 = vld [vmem:[%s1 + $0x7c] sm:$0xf]
  %v209 = vld [vmem:[%s1 + $0x80] sm:$0xf]
  %v210 = vld [vmem:[%s1 + $0x84] sm:$0xf]
  %v211 = vld [vmem:[%s1 + $0x88] sm:$0xf]
  %v212 = vld [vmem:[%s1 + $0x8c] sm:$0xf]
  %v213 = vld [vmem:[%s1 + $0x90] sm:$0xf]
  %v214 = vld [vmem:[%s1 + $0x94] sm:$0xf]
  %v215 = vld [vmem:[%s1 + $0x98] sm:$0xf]
  %v216 = vld [vmem:[%s1 + $0x9c] sm:$0xf]
  %v217 = vld [vmem:[%s1 + $0xa0] sm:$0xf]
  %v218 = vld [vmem:[%s1 + $0xa4] sm:$0xf]
  %v219 = vld [vmem:[%s1 + $0xa8] sm:$0xf]
  %v220 = vld [vmem:[%s1 + $0xac] sm:$0xf]
  %v221 = vld [vmem:[%s1 + $0xb0] sm:$0xf]
  %v222 = vld [vmem:[%s1 + $0xb4] sm:$0xf]
  %v223 = vld [vmem:[%s1 + $0xb8] sm:$0xf]
  %v224 = vld [vmem:[%s1 + $0xbc] sm:$0xf]
  %v273 = vunpack.c.l.b16 %v177
  %v274 = vunpack.c.l.b16 %v178
  %v275 = vunpack.c.l.b16 %v179
  %v276 = vunpack.c.l.b16 %v180
  %v277 = vunpack.c.l.b16 %v181
  %v278 = vunpack.c.l.b16 %v182
  %v279 = vunpack.c.l.b16 %v183
  %v280 = vunpack.c.l.b16 %v184
  %v281 = vunpack.c.l.b16 %v185
  %v282 = vunpack.c.l.b16 %v186
  %v283 = vunpack.c.l.b16 %v187
  %v284 = vunpack.c.l.b16 %v188
  %v285 = vunpack.c.l.b16 %v189
  %v286 = vunpack.c.l.b16 %v190
  %v287 = vunpack.c.l.b16 %v191
  %v288 = vunpack.c.l.b16 %v192
  %v289 = vunpack.c.l.b16 %v193
  %v290 = vunpack.c.l.b16 %v194
  %v291 = vunpack.c.l.b16 %v195
  %v292 = vunpack.c.l.b16 %v196
  %v293 = vunpack.c.l.b16 %v197
  %v294 = vunpack.c.l.b16 %v198
  %v295 = vunpack.c.l.b16 %v199
  %v296 = vunpack.c.l.b16 %v200
  %v297 = vunpack.c.l.b16 %v201
  %v298 = vunpack.c.l.b16 %v202
  %v299 = vunpack.c.l.b16 %v203
  %v300 = vunpack.c.l.b16 %v204
  %v301 = vunpack.c.l.b16 %v205
  %v302 = vunpack.c.l.b16 %v206
  %v303 = vunpack.c.l.b16 %v207
  %v304 = vunpack.c.l.b16 %v208
  %v305 = vunpack.c.l.b16 %v209
  %v306 = vunpack.c.l.b16 %v210
  %v307 = vunpack.c.l.b16 %v211
  %v308 = vunpack.c.l.b16 %v212
  %v309 = vunpack.c.l.b16 %v213
  %v310 = vunpack.c.l.b16 %v214
  %v311 = vunpack.c.l.b16 %v215
  %v312 = vunpack.c.l.b16 %v216
  %v313 = vunpack.c.l.b16 %v217
  %v314 = vunpack.c.l.b16 %v218
  %v315 = vunpack.c.l.b16 %v219
  %v316 = vunpack.c.l.b16 %v220
  %v317 = vunpack.c.l.b16 %v221
  %v318 = vunpack.c.l.b16 %v222
  %v319 = vunpack.c.l.b16 %v223
  %v320 = vunpack.c.l.b16 %v224
  %v321 = vpack.c.b16 %v274, %v273
  %v322 = vpack.c.b16 %v276, %v275
  %v323 = vpack.c.b16 %v278, %v277
  %v324 = vpack.c.b16 %v280, %v279
  %v325 = vpack.c.b16 %v282, %v281
  %v326 = vpack.c.b16 %v284, %v283
  %v327 = vpack.c.b16 %v286, %v285
  %v328 = vpack.c.b16 %v288, %v287
  %v329 = vpack.c.b16 %v290, %v289
  %v330 = vpack.c.b16 %v292, %v291
  %v331 = vpack.c.b16 %v294, %v293
  %v332 = vpack.c.b16 %v296, %v295
  %v333 = vpack.c.b16 %v298, %v297
  %v334 = vpack.c.b16 %v300, %v299
  %v335 = vpack.c.b16 %v302, %v301
  %v336 = vpack.c.b16 %v304, %v303
  %v337 = vpack.c.b16 %v306, %v305
  %v338 = vpack.c.b16 %v308, %v307
  %v339 = vpack.c.b16 %v310, %v309
  %v340 = vpack.c.b16 %v312, %v311
  %v341 = vpack.c.b16 %v314, %v313
  %v342 = vpack.c.b16 %v316, %v315
  %v343 = vpack.c.b16 %v318, %v317
  %v344 = vpack.c.b16 %v320, %v319
  %369 = vmatpush.bf16.msra.mxu0 %v328
  %370 = vmatpush.bf16.msra.mxu0 %v327
  %371 = vmatpush.bf16.msra.mxu0 %v326
  %372 = vmatpush.bf16.msra.mxu0 %v325
  %373 = vmatpush.bf16.msra.mxu0 %v324
  %374 = vmatpush.bf16.msra.mxu0 %v323
  %375 = vmatpush.bf16.msra.mxu0 %v322
  %376 = vmatpush.bf16.msra.mxu0 %v321
  %377 = vmatmul.bf16.gmra.mxu0 %v149
  %v378 = vpop.f32.mrf.mxu0
  %v379 = vadd.f32 0.0, %v378
  %v380 = vpop.f32.mrf.mxu0
  %v381 = vadd.f32 0.0, %v380
  %382 = vmatmul.bf16.gmra.mxu0 %v150
  %v383 = vpop.f32.mrf.mxu0
  %v384 = vadd.f32 0.0, %v383
  %v385 = vpop.f32.mrf.mxu0
  %v386 = vadd.f32 0.0, %v385
  %387 = vdwg.mxu0
  %388 = vmatpush.bf16.msra.mxu0 %v336
  %389 = vmatpush.bf16.msra.mxu0 %v335
  %390 = vmatpush.bf16.msra.mxu0 %v334
  %391 = vmatpush.bf16.msra.mxu0 %v333
  %392 = vmatpush.bf16.msra.mxu0 %v332
  %393 = vmatpush.bf16.msra.mxu0 %v331
  %394 = vmatpush.bf16.msra.mxu0 %v330
  %395 = vmatpush.bf16.msra.mxu0 %v329
  %396 = vmatmul.bf16.gmra.mxu0 %v161
  %v397 = vpop.f32.mrf.mxu0
  %v398 = vadd.f32 %v379, %v397
  %v399 = vpop.f32.mrf.mxu0
  %v400 = vadd.f32 %v381, %v399
  %401 = vmatmul.bf16.gmra.mxu0 %v162
  %v402 = vpop.f32.mrf.mxu0
  %v403 = vadd.f32 %v384, %v402
  %v404 = vpop.f32.mrf.mxu0
  %v405 = vadd.f32 %v386, %v404
  %406 = vdwg.mxu0
  %407 = vmatpush.bf16.msra.mxu0 %v344
  %408 = vmatpush.bf16.msra.mxu0 %v343
  %409 = vmatpush.bf16.msra.mxu0 %v342
  %410 = vmatpush.bf16.msra.mxu0 %v341
  %411 = vmatpush.bf16.msra.mxu0 %v340
  %412 = vmatpush.bf16.msra.mxu0 %v339
  %413 = vmatpush.bf16.msra.mxu0 %v338
  %414 = vmatpush.bf16.msra.mxu0 %v337
  %415 = vmatmul.bf16.gmra.mxu0 %v173
  %v416 = vpop.f32.mrf.mxu0
  %v417 = vadd.f32 %v398, %v416
  %v418 = vpop.f32.mrf.mxu0
  %v419 = vadd.f32 %v400, %v418
  %420 = vmatmul.bf16.gmra.mxu0 %v174
  %v421 = vpop.f32.mrf.mxu0
  %v422 = vadd.f32 %v403, %v421
  %v423 = vpop.f32.mrf.mxu0
  %v424 = vadd.f32 %v405, %v423
  %425 = vdwg.mxu0
  %v426 = vadd.f32 %v417, %v419
  %v427 = vadd.f32 %v426, %v422
  %v428 = vadd.f32 %v427, %v424
  %v429 = vrot.slane %v428, 4
  %v430 = vadd.f32 %v428, %v429
  %v431 = vrot.slane %v430, 2
  %v432 = vadd.f32 %v430, %v431
  %v433 = vrot.slane %v432, 1
  %v434 = vadd.f32 %v432, %v433
  %435 = vmatpush.msra.mxu0 %v37
  %436 = vmatpush.msra.mxu0 %v36
  %437 = vmatpush.msra.mxu0 %v35
  %438 = vmatpush.msra.mxu0 %v34
  %439 = vmatpush.msra.mxu0 %v33
  %440 = vmatpush.msra.mxu0 %v32
  %441 = vmatpush.msra.mxu0 %v31
  %442 = vmatpush.msra.mxu0 %v30
  %443 = vmatpush.msra.mxu0 %v29
  %444 = vmatpush.msra.mxu0 %v28
  %445 = vmatpush.msra.mxu0 %v27
  %446 = vmatpush.msra.mxu0 %v26
  %447 = vmatpush.msra.mxu0 %v25
  %448 = vmatpush.msra.mxu0 %v24
  %449 = vmatpush.msra.mxu0 %v23
  %450 = vmatpush.msra.mxu0 %v22
  %451 = vmatmul.f32.gmra.mxu0 %v434
  %v452 = vpop.f32.mrf.mxu0
  %v453 = vadd.f32 0.0, %v452
  %454 = vdwg.mxu0
  %v455 = vmul.f32 %v453, 0.001953125
  %v456 = vperm.slane %v455, 0
  %v457 = vsub.f32 %v417, %v456
  %v458 = vsub.f32 %v419, %v456
  %v459 = vsub.f32 %v422, %v456
  %v460 = vsub.f32 %v424, %v456
  %v461 = vmul.f32 %v457, %v457
  %v462 = vmul.f32 %v458, %v458
  %v463 = vmul.f32 %v459, %v459
  %v464 = vmul.f32 %v460, %v460
  %v465 = vadd.f32 %v461, %v462
  %v466 = vadd.f32 %v465, %v463
  %v467 = vadd.f32 %v466, %v464
  %v468 = vrot.slane %v467, 4
  %v469 = vadd.f32 %v467, %v468
  %v470 = vrot.slane %v469, 2
  %v471 = vadd.f32 %v469, %v470
  %v472 = vrot.slane %v471, 1
  %v473 = vadd.f32 %v471, %v472
  %474 = vmatpush.msra.mxu0 %v37
  %475 = vmatpush.msra.mxu0 %v36
  %476 = vmatpush.msra.mxu0 %v35
  %477 = vmatpush.msra.mxu0 %v34
  %478 = vmatpush.msra.mxu0 %v33
  %479 = vmatpush.msra.mxu0 %v32
  %480 = vmatpush.msra.mxu0 %v31
  %481 = vmatpush.msra.mxu0 %v30
  %482 = vmatpush.msra.mxu0 %v29
  %483 = vmatpush.msra.mxu0 %v28
  %484 = vmatpush.msra.mxu0 %v27
  %485 = vmatpush.msra.mxu0 %v26
  %486 = vmatpush.msra.mxu0 %v25
  %487 = vmatpush.msra.mxu0 %v24
  %488 = vmatpush.msra.mxu0 %v23
  %489 = vmatpush.msra.mxu0 %v22
  %490 = vmatmul.f32.gmra.mxu0 %v473
  %v491 = vpop.f32.mrf.mxu0
  %v492 = vadd.f32 0.0, %v491
  %493 = vdwg.mxu0
  %v494 = vmul.f32 %v492, 0.001953125
  %v495 = vadd.f32 %v494, 1e-05
  %v496 = vrsqrt.pop %v495
  %v497 = vmul.f32 %v496, %v495
  %v498 = vmul.f32 %v497, %v496
  %v499 = vmul.f32 0.5, %v498
  %v500 = vsub.f32 1.5, %v499
  %v501 = vmul.f32 %v496, %v500
  %vm502 = vweird.f32 %v495
  %vm503 = vweird.f32 %v496
  %vm504 = vmor %vm502, %vm503
  %v505 = vsel %vm504, %v496, %v501
  %v506 = vmul.f32 %v20, %v505
  %v507 = vperm.slane %v506, 0
  %v508 = vmul.f32 %v457, %v507
  %v509 = vmul.f32 %v458, %v507
  %v510 = vmul.f32 %v459, %v507
  %v511 = vmul.f32 %v460, %v507
  %v512 = vperm.slane %v21, 0
  %v513 = vadd.f32 %v508, %v512
  %v514 = vadd.f32 %v509, %v512
  %v515 = vadd.f32 %v510, %v512
  %v516 = vadd.f32 %v511, %v512
  %v517 = vmax.f32 %v513, 0.0
  %v518 = vmax.f32 %v514, 0.0
  %v519 = vmax.f32 %v515, 0.0
  %v520 = vmax.f32 %v516, 0.0
  %v521 = vrot.slane %v517, 7
  %v522 = vrot.slane %v518, 7
  %v523 = vrot.slane %v519, 7
  %v524 = vrot.slane %v520, 7
  %v525 = vsel %vm111, %v523, %v524
  %v526 = vsel %vm111, %v522, %v523
  %v527 = vsel %vm111, %v521, %v522
  %v528 = vsel %vm111, %v524, %v521
  %v529 = vsel %vm91, %v528, 0.0
  %v530 = vsel %vm92, %v527, 0.0
  %v531 = vsel %vm93, %v526, 0.0
  %v532 = vsel %vm94, %v525, 0.0
  %v533 = vpack.c.bf16 %v529, %v529
  %v534 = vpack.c.bf16 %v530, %v530
  %v535 = vpack.c.bf16 %v531, %v531
  %v536 = vpack.c.bf16 %v532, %v532
  %v537 = vpack.c.bf16 %v517, %v517
  %v538 = vpack.c.bf16 %v518, %v518
  %v539 = vpack.c.bf16 %v519, %v519
  %v540 = vpack.c.bf16 %v520, %v520
  %v541 = vrot.slane %v517, 1
  %v542 = vrot.slane %v518, 1
  %v543 = vrot.slane %v519, 1
  %v544 = vrot.slane %v520, 1
  %v545 = vsel %vm128, %v543, %v544
  %v546 = vsel %vm128, %v542, %v543
  %v547 = vsel %vm128, %v541, %v542
  %v548 = vsel %vm128, %v544, %v541
  %v549 = vsel %vm95, %v547, 0.0
  %v550 = vsel %vm96, %v546, 0.0
  %v551 = vsel %vm97, %v545, 0.0
  %v552 = vsel %vm98, %v548, 0.0
  %v553 = vpack.c.bf16 %v549, %v549
  %v554 = vpack.c.bf16 %v550, %v550
  %v555 = vpack.c.bf16 %v551, %v551
  %v556 = vpack.c.bf16 %v552, %v552
  %v561 = vunpack.c.l.b16 %v533
  %v562 = vunpack.c.l.b16 %v534
  %v563 = vunpack.c.l.b16 %v535
  %v564 = vunpack.c.l.b16 %v536
  %v565 = vpack.c.b16 %v562, %v561
  %v566 = vpack.c.b16 %v564, %v563
  %v573 = vunpack.c.l.b16 %v537
  %v574 = vunpack.c.l.b16 %v538
  %v575 = vunpack.c.l.b16 %v539
  %v576 = vunpack.c.l.b16 %v540
  %v577 = vpack.c.b16 %v574, %v573
  %v578 = vpack.c.b16 %v576, %v575
  %v585 = vunpack.c.l.b16 %v553
  %v586 = vunpack.c.l.b16 %v554
  %v587 = vunpack.c.l.b16 %v555
  %v588 = vunpack.c.l.b16 %v556
  %v589 = vpack.c.b16 %v586, %v585
  %v590 = vpack.c.b16 %v588, %v587
  %s593 = scalar_lea.vmem %s1, 192
  %v594 = vld [vmem:[%s593] sm:$0xf]
  %v595 = vld [vmem:[%s593 + $0x4] sm:$0xf]
  %v596 = vld [vmem:[%s593 + $0x8] sm:$0xf]
  %v597 = vld [vmem:[%s593 + $0xc] sm:$0xf]
  %v598 = vld [vmem:[%s593 + $0x10] sm:$0xf]
  %v599 = vld [vmem:[%s593 + $0x14] sm:$0xf]
  %v600 = vld [vmem:[%s593 + $0x18] sm:$0xf]
  %v601 = vld [vmem:[%s593 + $0x1c] sm:$0xf]
  %v602 = vld [vmem:[%s593 + $0x20] sm:$0xf]
  %v603 = vld [vmem:[%s593 + $0x24] sm:$0xf]
  %v604 = vld [vmem:[%s593 + $0x28] sm:$0xf]
  %v605 = vld [vmem:[%s593 + $0x2c] sm:$0xf]
  %v606 = vld [vmem:[%s593 + $0x30] sm:$0xf]
  %v607 = vld [vmem:[%s593 + $0x34] sm:$0xf]
  %v608 = vld [vmem:[%s593 + $0x38] sm:$0xf]
  %v609 = vld [vmem:[%s593 + $0x3c] sm:$0xf]
  %v610 = vld [vmem:[%s593 + $0x40] sm:$0xf]
  %v611 = vld [vmem:[%s593 + $0x44] sm:$0xf]
  %v612 = vld [vmem:[%s593 + $0x48] sm:$0xf]
  %v613 = vld [vmem:[%s593 + $0x4c] sm:$0xf]
  %v614 = vld [vmem:[%s593 + $0x50] sm:$0xf]
  %v615 = vld [vmem:[%s593 + $0x54] sm:$0xf]
  %v616 = vld [vmem:[%s593 + $0x58] sm:$0xf]
  %v617 = vld [vmem:[%s593 + $0x5c] sm:$0xf]
  %v618 = vld [vmem:[%s593 + $0x60] sm:$0xf]
  %v619 = vld [vmem:[%s593 + $0x64] sm:$0xf]
  %v620 = vld [vmem:[%s593 + $0x68] sm:$0xf]
  %v621 = vld [vmem:[%s593 + $0x6c] sm:$0xf]
  %v622 = vld [vmem:[%s593 + $0x70] sm:$0xf]
  %v623 = vld [vmem:[%s593 + $0x74] sm:$0xf]
  %v624 = vld [vmem:[%s593 + $0x78] sm:$0xf]
  %v625 = vld [vmem:[%s593 + $0x7c] sm:$0xf]
  %v626 = vld [vmem:[%s593 + $0x80] sm:$0xf]
  %v627 = vld [vmem:[%s593 + $0x84] sm:$0xf]
  %v628 = vld [vmem:[%s593 + $0x88] sm:$0xf]
  %v629 = vld [vmem:[%s593 + $0x8c] sm:$0xf]
  %v630 = vld [vmem:[%s593 + $0x90] sm:$0xf]
  %v631 = vld [vmem:[%s593 + $0x94] sm:$0xf]
  %v632 = vld [vmem:[%s593 + $0x98] sm:$0xf]
  %v633 = vld [vmem:[%s593 + $0x9c] sm:$0xf]
  %v634 = vld [vmem:[%s593 + $0xa0] sm:$0xf]
  %v635 = vld [vmem:[%s593 + $0xa4] sm:$0xf]
  %v636 = vld [vmem:[%s593 + $0xa8] sm:$0xf]
  %v637 = vld [vmem:[%s593 + $0xac] sm:$0xf]
  %v638 = vld [vmem:[%s593 + $0xb0] sm:$0xf]
  %v639 = vld [vmem:[%s593 + $0xb4] sm:$0xf]
  %v640 = vld [vmem:[%s593 + $0xb8] sm:$0xf]
  %v641 = vld [vmem:[%s593 + $0xbc] sm:$0xf]
  %v690 = vunpack.c.l.b16 %v594
  %v691 = vunpack.c.l.b16 %v595
  %v692 = vunpack.c.l.b16 %v596
  %v693 = vunpack.c.l.b16 %v597
  %v694 = vunpack.c.l.b16 %v598
  %v695 = vunpack.c.l.b16 %v599
  %v696 = vunpack.c.l.b16 %v600
  %v697 = vunpack.c.l.b16 %v601
  %v698 = vunpack.c.l.b16 %v602
  %v699 = vunpack.c.l.b16 %v603
  %v700 = vunpack.c.l.b16 %v604
  %v701 = vunpack.c.l.b16 %v605
  %v702 = vunpack.c.l.b16 %v606
  %v703 = vunpack.c.l.b16 %v607
  %v704 = vunpack.c.l.b16 %v608
  %v705 = vunpack.c.l.b16 %v609
  %v706 = vunpack.c.l.b16 %v610
  %v707 = vunpack.c.l.b16 %v611
  %v708 = vunpack.c.l.b16 %v612
  %v709 = vunpack.c.l.b16 %v613
  %v710 = vunpack.c.l.b16 %v614
  %v711 = vunpack.c.l.b16 %v615
  %v712 = vunpack.c.l.b16 %v616
  %v713 = vunpack.c.l.b16 %v617
  %v714 = vunpack.c.l.b16 %v618
  %v715 = vunpack.c.l.b16 %v619
  %v716 = vunpack.c.l.b16 %v620
  %v717 = vunpack.c.l.b16 %v621
  %v718 = vunpack.c.l.b16 %v622
  %v719 = vunpack.c.l.b16 %v623
  %v720 = vunpack.c.l.b16 %v624
  %v721 = vunpack.c.l.b16 %v625
  %v722 = vunpack.c.l.b16 %v626
  %v723 = vunpack.c.l.b16 %v627
  %v724 = vunpack.c.l.b16 %v628
  %v725 = vunpack.c.l.b16 %v629
  %v726 = vunpack.c.l.b16 %v630
  %v727 = vunpack.c.l.b16 %v631
  %v728 = vunpack.c.l.b16 %v632
  %v729 = vunpack.c.l.b16 %v633
  %v730 = vunpack.c.l.b16 %v634
  %v731 = vunpack.c.l.b16 %v635
  %v732 = vunpack.c.l.b16 %v636
  %v733 = vunpack.c.l.b16 %v637
  %v734 = vunpack.c.l.b16 %v638
  %v735 = vunpack.c.l.b16 %v639
  %v736 = vunpack.c.l.b16 %v640
  %v737 = vunpack.c.l.b16 %v641
  %v738 = vpack.c.b16 %v691, %v690
  %v739 = vpack.c.b16 %v693, %v692
  %v740 = vpack.c.b16 %v695, %v694
  %v741 = vpack.c.b16 %v697, %v696
  %v742 = vpack.c.b16 %v699, %v698
  %v743 = vpack.c.b16 %v701, %v700
  %v744 = vpack.c.b16 %v703, %v702
  %v745 = vpack.c.b16 %v705, %v704
  %v746 = vpack.c.b16 %v707, %v706
  %v747 = vpack.c.b16 %v709, %v708
  %v748 = vpack.c.b16 %v711, %v710
  %v749 = vpack.c.b16 %v713, %v712
  %v750 = vpack.c.b16 %v715, %v714
  %v751 = vpack.c.b16 %v717, %v716
  %v752 = vpack.c.b16 %v719, %v718
  %v753 = vpack.c.b16 %v721, %v720
  %v754 = vpack.c.b16 %v723, %v722
  %v755 = vpack.c.b16 %v725, %v724
  %v756 = vpack.c.b16 %v727, %v726
  %v757 = vpack.c.b16 %v729, %v728
  %v758 = vpack.c.b16 %v731, %v730
  %v759 = vpack.c.b16 %v733, %v732
  %v760 = vpack.c.b16 %v735, %v734
  %v761 = vpack.c.b16 %v737, %v736
  %786 = vmatpush.bf16.msra.mxu0 %v745
  %787 = vmatpush.bf16.msra.mxu0 %v744
  %788 = vmatpush.bf16.msra.mxu0 %v743
  %789 = vmatpush.bf16.msra.mxu0 %v742
  %790 = vmatpush.bf16.msra.mxu0 %v741
  %791 = vmatpush.bf16.msra.mxu0 %v740
  %792 = vmatpush.bf16.msra.mxu0 %v739
  %793 = vmatpush.bf16.msra.mxu0 %v738
  %794 = vmatmul.bf16.gmra.mxu0 %v565
  %v795 = vpop.f32.mrf.mxu0
  %v796 = vadd.f32 0.0, %v795
  %v797 = vpop.f32.mrf.mxu0
  %v798 = vadd.f32 0.0, %v797
  %799 = vmatmul.bf16.gmra.mxu0 %v566
  %v800 = vpop.f32.mrf.mxu0
  %v801 = vadd.f32 0.0, %v800
  %v802 = vpop.f32.mrf.mxu0
  %v803 = vadd.f32 0.0, %v802
  %804 = vdwg.mxu0
  %805 = vmatpush.bf16.msra.mxu0 %v753
  %806 = vmatpush.bf16.msra.mxu0 %v752
  %807 = vmatpush.bf16.msra.mxu0 %v751
  %808 = vmatpush.bf16.msra.mxu0 %v750
  %809 = vmatpush.bf16.msra.mxu0 %v749
  %810 = vmatpush.bf16.msra.mxu0 %v748
  %811 = vmatpush.bf16.msra.mxu0 %v747
  %812 = vmatpush.bf16.msra.mxu0 %v746
  %813 = vmatmul.bf16.gmra.mxu0 %v577
  %v814 = vpop.f32.mrf.mxu0
  %v815 = vadd.f32 %v796, %v814
  %v816 = vpop.f32.mrf.mxu0
  %v817 = vadd.f32 %v798, %v816
  %818 = vmatmul.bf16.gmra.mxu0 %v578
  %v819 = vpop.f32.mrf.mxu0
  %v820 = vadd.f32 %v801, %v819
  %v821 = vpop.f32.mrf.mxu0
  %v822 = vadd.f32 %v803, %v821
  %823 = vdwg.mxu0
  %824 = vmatpush.bf16.msra.mxu0 %v761
  %825 = vmatpush.bf16.msra.mxu0 %v760
  %826 = vmatpush.bf16.msra.mxu0 %v759
  %827 = vmatpush.bf16.msra.mxu0 %v758
  %828 = vmatpush.bf16.msra.mxu0 %v757
  %829 = vmatpush.bf16.msra.mxu0 %v756
  %830 = vmatpush.bf16.msra.mxu0 %v755
  %831 = vmatpush.bf16.msra.mxu0 %v754
  %832 = vmatmul.bf16.gmra.mxu0 %v589
  %v833 = vpop.f32.mrf.mxu0
  %v834 = vadd.f32 %v815, %v833
  %v835 = vpop.f32.mrf.mxu0
  %v836 = vadd.f32 %v817, %v835
  %837 = vmatmul.bf16.gmra.mxu0 %v590
  %v838 = vpop.f32.mrf.mxu0
  %v839 = vadd.f32 %v820, %v838
  %v840 = vpop.f32.mrf.mxu0
  %v841 = vadd.f32 %v822, %v840
  %842 = vdwg.mxu0
  %v843 = vadd.f32 %v834, %v836
  %v844 = vadd.f32 %v843, %v839
  %v845 = vadd.f32 %v844, %v841
  %v846 = vrot.slane %v845, 4
  %v847 = vadd.f32 %v845, %v846
  %v848 = vrot.slane %v847, 2
  %v849 = vadd.f32 %v847, %v848
  %v850 = vrot.slane %v849, 1
  %v851 = vadd.f32 %v849, %v850
  %852 = vmatpush.msra.mxu0 %v37
  %853 = vmatpush.msra.mxu0 %v36
  %854 = vmatpush.msra.mxu0 %v35
  %855 = vmatpush.msra.mxu0 %v34
  %856 = vmatpush.msra.mxu0 %v33
  %857 = vmatpush.msra.mxu0 %v32
  %858 = vmatpush.msra.mxu0 %v31
  %859 = vmatpush.msra.mxu0 %v30
  %860 = vmatpush.msra.mxu0 %v29
  %861 = vmatpush.msra.mxu0 %v28
  %862 = vmatpush.msra.mxu0 %v27
  %863 = vmatpush.msra.mxu0 %v26
  %864 = vmatpush.msra.mxu0 %v25
  %865 = vmatpush.msra.mxu0 %v24
  %866 = vmatpush.msra.mxu0 %v23
  %867 = vmatpush.msra.mxu0 %v22
  %868 = vmatmul.f32.gmra.mxu0 %v851
  %v869 = vpop.f32.mrf.mxu0
  %v870 = vadd.f32 0.0, %v869
  %871 = vdwg.mxu0
  %v872 = vmul.f32 %v870, 0.001953125
  %v873 = vperm.slane %v872, 0
  %v874 = vsub.f32 %v834, %v873
  %v875 = vsub.f32 %v836, %v873
  %v876 = vsub.f32 %v839, %v873
  %v877 = vsub.f32 %v841, %v873
  %v878 = vmul.f32 %v874, %v874
  %v879 = vmul.f32 %v875, %v875
  %v880 = vmul.f32 %v876, %v876
  %v881 = vmul.f32 %v877, %v877
  %v882 = vadd.f32 %v878, %v879
  %v883 = vadd.f32 %v882, %v880
  %v884 = vadd.f32 %v883, %v881
  %v885 = vrot.slane %v884, 4
  %v886 = vadd.f32 %v884, %v885
  %v887 = vrot.slane %v886, 2
  %v888 = vadd.f32 %v886, %v887
  %v889 = vrot.slane %v888, 1
  %v890 = vadd.f32 %v888, %v889
  %891 = vmatpush.msra.mxu0 %v37
  %892 = vmatpush.msra.mxu0 %v36
  %893 = vmatpush.msra.mxu0 %v35
  %894 = vmatpush.msra.mxu0 %v34
  %895 = vmatpush.msra.mxu0 %v33
  %896 = vmatpush.msra.mxu0 %v32
  %897 = vmatpush.msra.mxu0 %v31
  %898 = vmatpush.msra.mxu0 %v30
  %899 = vmatpush.msra.mxu0 %v29
  %900 = vmatpush.msra.mxu0 %v28
  %901 = vmatpush.msra.mxu0 %v27
  %902 = vmatpush.msra.mxu0 %v26
  %903 = vmatpush.msra.mxu0 %v25
  %904 = vmatpush.msra.mxu0 %v24
  %905 = vmatpush.msra.mxu0 %v23
  %906 = vmatpush.msra.mxu0 %v22
  %907 = vmatmul.f32.gmra.mxu0 %v890
  %v908 = vpop.f32.mrf.mxu0
  %v909 = vadd.f32 0.0, %v908
  %910 = vdwg.mxu0
  %v911 = vmul.f32 %v909, 0.001953125
  %v912 = vadd.f32 %v911, 1e-05
  %v913 = vrsqrt.pop %v912
  %v914 = vmul.f32 %v913, %v912
  %v915 = vmul.f32 %v914, %v913
  %v916 = vmul.f32 0.5, %v915
  %v917 = vsub.f32 1.5, %v916
  %v918 = vmul.f32 %v913, %v917
  %vm919 = vweird.f32 %v912
  %vm920 = vweird.f32 %v913
  %vm921 = vmor %vm919, %vm920
  %v922 = vsel %vm921, %v913, %v918
  %v924 = vrot.slane %v922, 7
  %v926 = vmul.f32 %v20, %v924
  %v927 = vperm.slane %v926, 1
  %v928 = vmul.f32 %v874, %v927
  %v929 = vmul.f32 %v875, %v927
  %v930 = vmul.f32 %v876, %v927
  %v931 = vmul.f32 %v877, %v927
  %v932 = vperm.slane %v21, 1
  %v933 = vadd.f32 %v928, %v932
  %v934 = vadd.f32 %v929, %v932
  %v935 = vadd.f32 %v930, %v932
  %v936 = vadd.f32 %v931, %v932
  %v937 = vmax.f32 %v933, 0.0
  %v938 = vmax.f32 %v934, 0.0
  %v939 = vmax.f32 %v935, 0.0
  %v940 = vmax.f32 %v936, 0.0
  %v941 = vrot.slane %v937, 7
  %v942 = vrot.slane %v938, 7
  %v943 = vrot.slane %v939, 7
  %v944 = vrot.slane %v940, 7
  %v945 = vsel %vm111, %v943, %v944
  %v946 = vsel %vm111, %v942, %v943
  %v947 = vsel %vm111, %v941, %v942
  %v948 = vsel %vm111, %v944, %v941
  %v949 = vsel %vm91, %v948, 0.0
  %v950 = vsel %vm92, %v947, 0.0
  %v951 = vsel %vm93, %v946, 0.0
  %v952 = vsel %vm94, %v945, 0.0
  %v953 = vpack.c.bf16 %v949, %v949
  %v954 = vpack.c.bf16 %v950, %v950
  %v955 = vpack.c.bf16 %v951, %v951
  %v956 = vpack.c.bf16 %v952, %v952
  %v957 = vpack.c.bf16 %v937, %v937
  %v958 = vpack.c.bf16 %v938, %v938
  %v959 = vpack.c.bf16 %v939, %v939
  %v960 = vpack.c.bf16 %v940, %v940
  %v961 = vrot.slane %v937, 1
  %v962 = vrot.slane %v938, 1
  %v963 = vrot.slane %v939, 1
  %v964 = vrot.slane %v940, 1
  %v965 = vsel %vm128, %v963, %v964
  %v966 = vsel %vm128, %v962, %v963
  %v967 = vsel %vm128, %v961, %v962
  %v968 = vsel %vm128, %v964, %v961
  %v969 = vsel %vm95, %v967, 0.0
  %v970 = vsel %vm96, %v966, 0.0
  %v971 = vsel %vm97, %v965, 0.0
  %v972 = vsel %vm98, %v968, 0.0
  %v973 = vpack.c.bf16 %v969, %v969
  %v974 = vpack.c.bf16 %v970, %v970
  %v975 = vpack.c.bf16 %v971, %v971
  %v976 = vpack.c.bf16 %v972, %v972
  %v981 = vunpack.c.l.b16 %v953
  %v982 = vunpack.c.l.b16 %v954
  %v983 = vunpack.c.l.b16 %v955
  %v984 = vunpack.c.l.b16 %v956
  %v985 = vpack.c.b16 %v982, %v981
  %v986 = vpack.c.b16 %v984, %v983
  %v993 = vunpack.c.l.b16 %v957
  %v994 = vunpack.c.l.b16 %v958
  %v995 = vunpack.c.l.b16 %v959
  %v996 = vunpack.c.l.b16 %v960
  %v997 = vpack.c.b16 %v994, %v993
  %v998 = vpack.c.b16 %v996, %v995
  %v1005 = vunpack.c.l.b16 %v973
  %v1006 = vunpack.c.l.b16 %v974
  %v1007 = vunpack.c.l.b16 %v975
  %v1008 = vunpack.c.l.b16 %v976
  %v1009 = vpack.c.b16 %v1006, %v1005
  %v1010 = vpack.c.b16 %v1008, %v1007
  %s1013 = scalar_lea.vmem %s1, 384
  %v1014 = vld [vmem:[%s1013] sm:$0xf]
  %v1015 = vld [vmem:[%s1013 + $0x4] sm:$0xf]
  %v1016 = vld [vmem:[%s1013 + $0x8] sm:$0xf]
  %v1017 = vld [vmem:[%s1013 + $0xc] sm:$0xf]
  %v1018 = vld [vmem:[%s1013 + $0x10] sm:$0xf]
  %v1019 = vld [vmem:[%s1013 + $0x14] sm:$0xf]
  %v1020 = vld [vmem:[%s1013 + $0x18] sm:$0xf]
  %v1021 = vld [vmem:[%s1013 + $0x1c] sm:$0xf]
  %v1022 = vld [vmem:[%s1013 + $0x20] sm:$0xf]
  %v1023 = vld [vmem:[%s1013 + $0x24] sm:$0xf]
  %v1024 = vld [vmem:[%s1013 + $0x28] sm:$0xf]
  %v1025 = vld [vmem:[%s1013 + $0x2c] sm:$0xf]
  %v1026 = vld [vmem:[%s1013 + $0x30] sm:$0xf]
  %v1027 = vld [vmem:[%s1013 + $0x34] sm:$0xf]
  %v1028 = vld [vmem:[%s1013 + $0x38] sm:$0xf]
  %v1029 = vld [vmem:[%s1013 + $0x3c] sm:$0xf]
  %v1030 = vld [vmem:[%s1013 + $0x40] sm:$0xf]
  %v1031 = vld [vmem:[%s1013 + $0x44] sm:$0xf]
  %v1032 = vld [vmem:[%s1013 + $0x48] sm:$0xf]
  %v1033 = vld [vmem:[%s1013 + $0x4c] sm:$0xf]
  %v1034 = vld [vmem:[%s1013 + $0x50] sm:$0xf]
  %v1035 = vld [vmem:[%s1013 + $0x54] sm:$0xf]
  %v1036 = vld [vmem:[%s1013 + $0x58] sm:$0xf]
  %v1037 = vld [vmem:[%s1013 + $0x5c] sm:$0xf]
  %v1038 = vld [vmem:[%s1013 + $0x60] sm:$0xf]
  %v1039 = vld [vmem:[%s1013 + $0x64] sm:$0xf]
  %v1040 = vld [vmem:[%s1013 + $0x68] sm:$0xf]
  %v1041 = vld [vmem:[%s1013 + $0x6c] sm:$0xf]
  %v1042 = vld [vmem:[%s1013 + $0x70] sm:$0xf]
  %v1043 = vld [vmem:[%s1013 + $0x74] sm:$0xf]
  %v1044 = vld [vmem:[%s1013 + $0x78] sm:$0xf]
  %v1045 = vld [vmem:[%s1013 + $0x7c] sm:$0xf]
  %v1046 = vld [vmem:[%s1013 + $0x80] sm:$0xf]
  %v1047 = vld [vmem:[%s1013 + $0x84] sm:$0xf]
  %v1048 = vld [vmem:[%s1013 + $0x88] sm:$0xf]
  %v1049 = vld [vmem:[%s1013 + $0x8c] sm:$0xf]
  %v1050 = vld [vmem:[%s1013 + $0x90] sm:$0xf]
  %v1051 = vld [vmem:[%s1013 + $0x94] sm:$0xf]
  %v1052 = vld [vmem:[%s1013 + $0x98] sm:$0xf]
  %v1053 = vld [vmem:[%s1013 + $0x9c] sm:$0xf]
  %v1054 = vld [vmem:[%s1013 + $0xa0] sm:$0xf]
  %v1055 = vld [vmem:[%s1013 + $0xa4] sm:$0xf]
  %v1056 = vld [vmem:[%s1013 + $0xa8] sm:$0xf]
  %v1057 = vld [vmem:[%s1013 + $0xac] sm:$0xf]
  %v1058 = vld [vmem:[%s1013 + $0xb0] sm:$0xf]
  %v1059 = vld [vmem:[%s1013 + $0xb4] sm:$0xf]
  %v1060 = vld [vmem:[%s1013 + $0xb8] sm:$0xf]
  %v1061 = vld [vmem:[%s1013 + $0xbc] sm:$0xf]
  %v1110 = vunpack.c.l.b16 %v1014
  %v1111 = vunpack.c.l.b16 %v1015
  %v1112 = vunpack.c.l.b16 %v1016
  %v1113 = vunpack.c.l.b16 %v1017
  %v1114 = vunpack.c.l.b16 %v1018
  %v1115 = vunpack.c.l.b16 %v1019
  %v1116 = vunpack.c.l.b16 %v1020
  %v1117 = vunpack.c.l.b16 %v1021
  %v1118 = vunpack.c.l.b16 %v1022
  %v1119 = vunpack.c.l.b16 %v1023
  %v1120 = vunpack.c.l.b16 %v1024
  %v1121 = vunpack.c.l.b16 %v1025
  %v1122 = vunpack.c.l.b16 %v1026
  %v1123 = vunpack.c.l.b16 %v1027
  %v1124 = vunpack.c.l.b16 %v1028
  %v1125 = vunpack.c.l.b16 %v1029
  %v1126 = vunpack.c.l.b16 %v1030
  %v1127 = vunpack.c.l.b16 %v1031
  %v1128 = vunpack.c.l.b16 %v1032
  %v1129 = vunpack.c.l.b16 %v1033
  %v1130 = vunpack.c.l.b16 %v1034
  %v1131 = vunpack.c.l.b16 %v1035
  %v1132 = vunpack.c.l.b16 %v1036
  %v1133 = vunpack.c.l.b16 %v1037
  %v1134 = vunpack.c.l.b16 %v1038
  %v1135 = vunpack.c.l.b16 %v1039
  %v1136 = vunpack.c.l.b16 %v1040
  %v1137 = vunpack.c.l.b16 %v1041
  %v1138 = vunpack.c.l.b16 %v1042
  %v1139 = vunpack.c.l.b16 %v1043
  %v1140 = vunpack.c.l.b16 %v1044
  %v1141 = vunpack.c.l.b16 %v1045
  %v1142 = vunpack.c.l.b16 %v1046
  %v1143 = vunpack.c.l.b16 %v1047
  %v1144 = vunpack.c.l.b16 %v1048
  %v1145 = vunpack.c.l.b16 %v1049
  %v1146 = vunpack.c.l.b16 %v1050
  %v1147 = vunpack.c.l.b16 %v1051
  %v1148 = vunpack.c.l.b16 %v1052
  %v1149 = vunpack.c.l.b16 %v1053
  %v1150 = vunpack.c.l.b16 %v1054
  %v1151 = vunpack.c.l.b16 %v1055
  %v1152 = vunpack.c.l.b16 %v1056
  %v1153 = vunpack.c.l.b16 %v1057
  %v1154 = vunpack.c.l.b16 %v1058
  %v1155 = vunpack.c.l.b16 %v1059
  %v1156 = vunpack.c.l.b16 %v1060
  %v1157 = vunpack.c.l.b16 %v1061
  %v1158 = vpack.c.b16 %v1111, %v1110
  %v1159 = vpack.c.b16 %v1113, %v1112
  %v1160 = vpack.c.b16 %v1115, %v1114
  %v1161 = vpack.c.b16 %v1117, %v1116
  %v1162 = vpack.c.b16 %v1119, %v1118
  %v1163 = vpack.c.b16 %v1121, %v1120
  %v1164 = vpack.c.b16 %v1123, %v1122
  %v1165 = vpack.c.b16 %v1125, %v1124
  %v1166 = vpack.c.b16 %v1127, %v1126
  %v1167 = vpack.c.b16 %v1129, %v1128
  %v1168 = vpack.c.b16 %v1131, %v1130
  %v1169 = vpack.c.b16 %v1133, %v1132
  %v1170 = vpack.c.b16 %v1135, %v1134
  %v1171 = vpack.c.b16 %v1137, %v1136
  %v1172 = vpack.c.b16 %v1139, %v1138
  %v1173 = vpack.c.b16 %v1141, %v1140
  %v1174 = vpack.c.b16 %v1143, %v1142
  %v1175 = vpack.c.b16 %v1145, %v1144
  %v1176 = vpack.c.b16 %v1147, %v1146
  %v1177 = vpack.c.b16 %v1149, %v1148
  %v1178 = vpack.c.b16 %v1151, %v1150
  %v1179 = vpack.c.b16 %v1153, %v1152
  %v1180 = vpack.c.b16 %v1155, %v1154
  %v1181 = vpack.c.b16 %v1157, %v1156
  %1206 = vmatpush.bf16.msra.mxu0 %v1165
  %1207 = vmatpush.bf16.msra.mxu0 %v1164
  %1208 = vmatpush.bf16.msra.mxu0 %v1163
  %1209 = vmatpush.bf16.msra.mxu0 %v1162
  %1210 = vmatpush.bf16.msra.mxu0 %v1161
  %1211 = vmatpush.bf16.msra.mxu0 %v1160
  %1212 = vmatpush.bf16.msra.mxu0 %v1159
  %1213 = vmatpush.bf16.msra.mxu0 %v1158
  %1214 = vmatmul.bf16.gmra.mxu0 %v985
  %v1215 = vpop.f32.mrf.mxu0
  %v1216 = vadd.f32 0.0, %v1215
  %v1217 = vpop.f32.mrf.mxu0
  %v1218 = vadd.f32 0.0, %v1217
  %1219 = vmatmul.bf16.gmra.mxu0 %v986
  %v1220 = vpop.f32.mrf.mxu0
  %v1221 = vadd.f32 0.0, %v1220
  %v1222 = vpop.f32.mrf.mxu0
  %v1223 = vadd.f32 0.0, %v1222
  %1224 = vdwg.mxu0
  %1225 = vmatpush.bf16.msra.mxu0 %v1173
  %1226 = vmatpush.bf16.msra.mxu0 %v1172
  %1227 = vmatpush.bf16.msra.mxu0 %v1171
  %1228 = vmatpush.bf16.msra.mxu0 %v1170
  %1229 = vmatpush.bf16.msra.mxu0 %v1169
  %1230 = vmatpush.bf16.msra.mxu0 %v1168
  %1231 = vmatpush.bf16.msra.mxu0 %v1167
  %1232 = vmatpush.bf16.msra.mxu0 %v1166
  %1233 = vmatmul.bf16.gmra.mxu0 %v997
  %v1234 = vpop.f32.mrf.mxu0
  %v1235 = vadd.f32 %v1216, %v1234
  %v1236 = vpop.f32.mrf.mxu0
  %v1237 = vadd.f32 %v1218, %v1236
  %1238 = vmatmul.bf16.gmra.mxu0 %v998
  %v1239 = vpop.f32.mrf.mxu0
  %v1240 = vadd.f32 %v1221, %v1239
  %v1241 = vpop.f32.mrf.mxu0
  %v1242 = vadd.f32 %v1223, %v1241
  %1243 = vdwg.mxu0
  %1244 = vmatpush.bf16.msra.mxu0 %v1181
  %1245 = vmatpush.bf16.msra.mxu0 %v1180
  %1246 = vmatpush.bf16.msra.mxu0 %v1179
  %1247 = vmatpush.bf16.msra.mxu0 %v1178
  %1248 = vmatpush.bf16.msra.mxu0 %v1177
  %1249 = vmatpush.bf16.msra.mxu0 %v1176
  %1250 = vmatpush.bf16.msra.mxu0 %v1175
  %1251 = vmatpush.bf16.msra.mxu0 %v1174
  %1252 = vmatmul.bf16.gmra.mxu0 %v1009
  %v1253 = vpop.f32.mrf.mxu0
  %v1254 = vadd.f32 %v1235, %v1253
  %v1255 = vpop.f32.mrf.mxu0
  %v1256 = vadd.f32 %v1237, %v1255
  %1257 = vmatmul.bf16.gmra.mxu0 %v1010
  %v1258 = vpop.f32.mrf.mxu0
  %v1259 = vadd.f32 %v1240, %v1258
  %v1260 = vpop.f32.mrf.mxu0
  %v1261 = vadd.f32 %v1242, %v1260
  %1262 = vdwg.mxu0
  %v1263 = vadd.f32 %v1254, %v1256
  %v1264 = vadd.f32 %v1263, %v1259
  %v1265 = vadd.f32 %v1264, %v1261
  %v1266 = vrot.slane %v1265, 4
  %v1267 = vadd.f32 %v1265, %v1266
  %v1268 = vrot.slane %v1267, 2
  %v1269 = vadd.f32 %v1267, %v1268
  %v1270 = vrot.slane %v1269, 1
  %v1271 = vadd.f32 %v1269, %v1270
  %1272 = vmatpush.msra.mxu0 %v37
  %1273 = vmatpush.msra.mxu0 %v36
  %1274 = vmatpush.msra.mxu0 %v35
  %1275 = vmatpush.msra.mxu0 %v34
  %1276 = vmatpush.msra.mxu0 %v33
  %1277 = vmatpush.msra.mxu0 %v32
  %1278 = vmatpush.msra.mxu0 %v31
  %1279 = vmatpush.msra.mxu0 %v30
  %1280 = vmatpush.msra.mxu0 %v29
  %1281 = vmatpush.msra.mxu0 %v28
  %1282 = vmatpush.msra.mxu0 %v27
  %1283 = vmatpush.msra.mxu0 %v26
  %1284 = vmatpush.msra.mxu0 %v25
  %1285 = vmatpush.msra.mxu0 %v24
  %1286 = vmatpush.msra.mxu0 %v23
  %1287 = vmatpush.msra.mxu0 %v22
  %1288 = vmatmul.f32.gmra.mxu0 %v1271
  %v1289 = vpop.f32.mrf.mxu0
  %v1290 = vadd.f32 0.0, %v1289
  %1291 = vdwg.mxu0
  %v1292 = vmul.f32 %v1290, 0.001953125
  %v1293 = vperm.slane %v1292, 0
  %v1294 = vsub.f32 %v1254, %v1293
  %v1295 = vsub.f32 %v1256, %v1293
  %v1296 = vsub.f32 %v1259, %v1293
  %v1297 = vsub.f32 %v1261, %v1293
  %v1298 = vmul.f32 %v1294, %v1294
  %v1299 = vmul.f32 %v1295, %v1295
  %v1300 = vmul.f32 %v1296, %v1296
  %v1301 = vmul.f32 %v1297, %v1297
  %v1302 = vadd.f32 %v1298, %v1299
  %v1303 = vadd.f32 %v1302, %v1300
  %v1304 = vadd.f32 %v1303, %v1301
  %v1305 = vrot.slane %v1304, 4
  %v1306 = vadd.f32 %v1304, %v1305
  %v1307 = vrot.slane %v1306, 2
  %v1308 = vadd.f32 %v1306, %v1307
  %v1309 = vrot.slane %v1308, 1
  %v1310 = vadd.f32 %v1308, %v1309
  %1311 = vmatpush.msra.mxu0 %v37
  %1312 = vmatpush.msra.mxu0 %v36
  %1313 = vmatpush.msra.mxu0 %v35
  %1314 = vmatpush.msra.mxu0 %v34
  %1315 = vmatpush.msra.mxu0 %v33
  %1316 = vmatpush.msra.mxu0 %v32
  %1317 = vmatpush.msra.mxu0 %v31
  %1318 = vmatpush.msra.mxu0 %v30
  %1319 = vmatpush.msra.mxu0 %v29
  %1320 = vmatpush.msra.mxu0 %v28
  %1321 = vmatpush.msra.mxu0 %v27
  %1322 = vmatpush.msra.mxu0 %v26
  %1323 = vmatpush.msra.mxu0 %v25
  %1324 = vmatpush.msra.mxu0 %v24
  %1325 = vmatpush.msra.mxu0 %v23
  %1326 = vmatpush.msra.mxu0 %v22
  %1327 = vmatmul.f32.gmra.mxu0 %v1310
  %v1328 = vpop.f32.mrf.mxu0
  %v1329 = vadd.f32 0.0, %v1328
  %1330 = vdwg.mxu0
  %v1331 = vmul.f32 %v1329, 0.001953125
  %v1332 = vadd.f32 %v1331, 1e-05
  %v1333 = vrsqrt.pop %v1332
  %v1334 = vmul.f32 %v1333, %v1332
  %v1335 = vmul.f32 %v1334, %v1333
  %v1336 = vmul.f32 0.5, %v1335
  %v1337 = vsub.f32 1.5, %v1336
  %v1338 = vmul.f32 %v1333, %v1337
  %vm1339 = vweird.f32 %v1332
  %vm1340 = vweird.f32 %v1333
  %vm1341 = vmor %vm1339, %vm1340
  %v1342 = vsel %vm1341, %v1333, %v1338
  %v1344 = vrot.slane %v1342, 6
  %v1346 = vmul.f32 %v20, %v1344
  %v1347 = vperm.slane %v1346, 2
  %v1348 = vmul.f32 %v1294, %v1347
  %v1349 = vmul.f32 %v1295, %v1347
  %v1350 = vmul.f32 %v1296, %v1347
  %v1351 = vmul.f32 %v1297, %v1347
  %v1352 = vperm.slane %v21, 2
  %v1353 = vadd.f32 %v1348, %v1352
  %v1354 = vadd.f32 %v1349, %v1352
  %v1355 = vadd.f32 %v1350, %v1352
  %v1356 = vadd.f32 %v1351, %v1352
  %v1357 = vmax.f32 %v1353, 0.0
  %v1358 = vmax.f32 %v1354, 0.0
  %v1359 = vmax.f32 %v1355, 0.0
  %v1360 = vmax.f32 %v1356, 0.0
  %v1361 = vrot.slane %v1357, 7
  %v1362 = vrot.slane %v1358, 7
  %v1363 = vrot.slane %v1359, 7
  %v1364 = vrot.slane %v1360, 7
  %v1365 = vsel %vm111, %v1363, %v1364
  %v1366 = vsel %vm111, %v1362, %v1363
  %v1367 = vsel %vm111, %v1361, %v1362
  %v1368 = vsel %vm111, %v1364, %v1361
  %v1369 = vsel %vm91, %v1368, 0.0
  %v1370 = vsel %vm92, %v1367, 0.0
  %v1371 = vsel %vm93, %v1366, 0.0
  %v1372 = vsel %vm94, %v1365, 0.0
  %v1373 = vpack.c.bf16 %v1369, %v1369
  %v1374 = vpack.c.bf16 %v1370, %v1370
  %v1375 = vpack.c.bf16 %v1371, %v1371
  %v1376 = vpack.c.bf16 %v1372, %v1372
  %v1377 = vpack.c.bf16 %v1357, %v1357
  %v1378 = vpack.c.bf16 %v1358, %v1358
  %v1379 = vpack.c.bf16 %v1359, %v1359
  %v1380 = vpack.c.bf16 %v1360, %v1360
  %v1381 = vrot.slane %v1357, 1
  %v1382 = vrot.slane %v1358, 1
  %v1383 = vrot.slane %v1359, 1
  %v1384 = vrot.slane %v1360, 1
  %v1385 = vsel %vm128, %v1383, %v1384
  %v1386 = vsel %vm128, %v1382, %v1383
  %v1387 = vsel %vm128, %v1381, %v1382
  %v1388 = vsel %vm128, %v1384, %v1381
  %v1389 = vsel %vm95, %v1387, 0.0
  %v1390 = vsel %vm96, %v1386, 0.0
  %v1391 = vsel %vm97, %v1385, 0.0
  %v1392 = vsel %vm98, %v1388, 0.0
  %v1393 = vpack.c.bf16 %v1389, %v1389
  %v1394 = vpack.c.bf16 %v1390, %v1390
  %v1395 = vpack.c.bf16 %v1391, %v1391
  %v1396 = vpack.c.bf16 %v1392, %v1392
  %v1401 = vunpack.c.l.b16 %v1373
  %v1402 = vunpack.c.l.b16 %v1374
  %v1403 = vunpack.c.l.b16 %v1375
  %v1404 = vunpack.c.l.b16 %v1376
  %v1405 = vpack.c.b16 %v1402, %v1401
  %v1406 = vpack.c.b16 %v1404, %v1403
  %v1413 = vunpack.c.l.b16 %v1377
  %v1414 = vunpack.c.l.b16 %v1378
  %v1415 = vunpack.c.l.b16 %v1379
  %v1416 = vunpack.c.l.b16 %v1380
  %v1417 = vpack.c.b16 %v1414, %v1413
  %v1418 = vpack.c.b16 %v1416, %v1415
  %v1425 = vunpack.c.l.b16 %v1393
  %v1426 = vunpack.c.l.b16 %v1394
  %v1427 = vunpack.c.l.b16 %v1395
  %v1428 = vunpack.c.l.b16 %v1396
  %v1429 = vpack.c.b16 %v1426, %v1425
  %v1430 = vpack.c.b16 %v1428, %v1427
  %s1433 = scalar_lea.vmem %s1, 576
  %v1434 = vld [vmem:[%s1433] sm:$0xf]
  %v1435 = vld [vmem:[%s1433 + $0x4] sm:$0xf]
  %v1436 = vld [vmem:[%s1433 + $0x8] sm:$0xf]
  %v1437 = vld [vmem:[%s1433 + $0xc] sm:$0xf]
  %v1438 = vld [vmem:[%s1433 + $0x10] sm:$0xf]
  %v1439 = vld [vmem:[%s1433 + $0x14] sm:$0xf]
  %v1440 = vld [vmem:[%s1433 + $0x18] sm:$0xf]
  %v1441 = vld [vmem:[%s1433 + $0x1c] sm:$0xf]
  %v1442 = vld [vmem:[%s1433 + $0x20] sm:$0xf]
  %v1443 = vld [vmem:[%s1433 + $0x24] sm:$0xf]
  %v1444 = vld [vmem:[%s1433 + $0x28] sm:$0xf]
  %v1445 = vld [vmem:[%s1433 + $0x2c] sm:$0xf]
  %v1446 = vld [vmem:[%s1433 + $0x30] sm:$0xf]
  %v1447 = vld [vmem:[%s1433 + $0x34] sm:$0xf]
  %v1448 = vld [vmem:[%s1433 + $0x38] sm:$0xf]
  %v1449 = vld [vmem:[%s1433 + $0x3c] sm:$0xf]
  %v1450 = vld [vmem:[%s1433 + $0x40] sm:$0xf]
  %v1451 = vld [vmem:[%s1433 + $0x44] sm:$0xf]
  %v1452 = vld [vmem:[%s1433 + $0x48] sm:$0xf]
  %v1453 = vld [vmem:[%s1433 + $0x4c] sm:$0xf]
  %v1454 = vld [vmem:[%s1433 + $0x50] sm:$0xf]
  %v1455 = vld [vmem:[%s1433 + $0x54] sm:$0xf]
  %v1456 = vld [vmem:[%s1433 + $0x58] sm:$0xf]
  %v1457 = vld [vmem:[%s1433 + $0x5c] sm:$0xf]
  %v1458 = vld [vmem:[%s1433 + $0x60] sm:$0xf]
  %v1459 = vld [vmem:[%s1433 + $0x64] sm:$0xf]
  %v1460 = vld [vmem:[%s1433 + $0x68] sm:$0xf]
  %v1461 = vld [vmem:[%s1433 + $0x6c] sm:$0xf]
  %v1462 = vld [vmem:[%s1433 + $0x70] sm:$0xf]
  %v1463 = vld [vmem:[%s1433 + $0x74] sm:$0xf]
  %v1464 = vld [vmem:[%s1433 + $0x78] sm:$0xf]
  %v1465 = vld [vmem:[%s1433 + $0x7c] sm:$0xf]
  %v1466 = vld [vmem:[%s1433 + $0x80] sm:$0xf]
  %v1467 = vld [vmem:[%s1433 + $0x84] sm:$0xf]
  %v1468 = vld [vmem:[%s1433 + $0x88] sm:$0xf]
  %v1469 = vld [vmem:[%s1433 + $0x8c] sm:$0xf]
  %v1470 = vld [vmem:[%s1433 + $0x90] sm:$0xf]
  %v1471 = vld [vmem:[%s1433 + $0x94] sm:$0xf]
  %v1472 = vld [vmem:[%s1433 + $0x98] sm:$0xf]
  %v1473 = vld [vmem:[%s1433 + $0x9c] sm:$0xf]
  %v1474 = vld [vmem:[%s1433 + $0xa0] sm:$0xf]
  %v1475 = vld [vmem:[%s1433 + $0xa4] sm:$0xf]
  %v1476 = vld [vmem:[%s1433 + $0xa8] sm:$0xf]
  %v1477 = vld [vmem:[%s1433 + $0xac] sm:$0xf]
  %v1478 = vld [vmem:[%s1433 + $0xb0] sm:$0xf]
  %v1479 = vld [vmem:[%s1433 + $0xb4] sm:$0xf]
  %v1480 = vld [vmem:[%s1433 + $0xb8] sm:$0xf]
  %v1481 = vld [vmem:[%s1433 + $0xbc] sm:$0xf]
  %v1530 = vunpack.c.l.b16 %v1434
  %v1531 = vunpack.c.l.b16 %v1435
  %v1532 = vunpack.c.l.b16 %v1436
  %v1533 = vunpack.c.l.b16 %v1437
  %v1534 = vunpack.c.l.b16 %v1438
  %v1535 = vunpack.c.l.b16 %v1439
  %v1536 = vunpack.c.l.b16 %v1440
  %v1537 = vunpack.c.l.b16 %v1441
  %v1538 = vunpack.c.l.b16 %v1442
  %v1539 = vunpack.c.l.b16 %v1443
  %v1540 = vunpack.c.l.b16 %v1444
  %v1541 = vunpack.c.l.b16 %v1445
  %v1542 = vunpack.c.l.b16 %v1446
  %v1543 = vunpack.c.l.b16 %v1447
  %v1544 = vunpack.c.l.b16 %v1448
  %v1545 = vunpack.c.l.b16 %v1449
  %v1546 = vunpack.c.l.b16 %v1450
  %v1547 = vunpack.c.l.b16 %v1451
  %v1548 = vunpack.c.l.b16 %v1452
  %v1549 = vunpack.c.l.b16 %v1453
  %v1550 = vunpack.c.l.b16 %v1454
  %v1551 = vunpack.c.l.b16 %v1455
  %v1552 = vunpack.c.l.b16 %v1456
  %v1553 = vunpack.c.l.b16 %v1457
  %v1554 = vunpack.c.l.b16 %v1458
  %v1555 = vunpack.c.l.b16 %v1459
  %v1556 = vunpack.c.l.b16 %v1460
  %v1557 = vunpack.c.l.b16 %v1461
  %v1558 = vunpack.c.l.b16 %v1462
  %v1559 = vunpack.c.l.b16 %v1463
  %v1560 = vunpack.c.l.b16 %v1464
  %v1561 = vunpack.c.l.b16 %v1465
  %v1562 = vunpack.c.l.b16 %v1466
  %v1563 = vunpack.c.l.b16 %v1467
  %v1564 = vunpack.c.l.b16 %v1468
  %v1565 = vunpack.c.l.b16 %v1469
  %v1566 = vunpack.c.l.b16 %v1470
  %v1567 = vunpack.c.l.b16 %v1471
  %v1568 = vunpack.c.l.b16 %v1472
  %v1569 = vunpack.c.l.b16 %v1473
  %v1570 = vunpack.c.l.b16 %v1474
  %v1571 = vunpack.c.l.b16 %v1475
  %v1572 = vunpack.c.l.b16 %v1476
  %v1573 = vunpack.c.l.b16 %v1477
  %v1574 = vunpack.c.l.b16 %v1478
  %v1575 = vunpack.c.l.b16 %v1479
  %v1576 = vunpack.c.l.b16 %v1480
  %v1577 = vunpack.c.l.b16 %v1481
  %v1578 = vpack.c.b16 %v1531, %v1530
  %v1579 = vpack.c.b16 %v1533, %v1532
  %v1580 = vpack.c.b16 %v1535, %v1534
  %v1581 = vpack.c.b16 %v1537, %v1536
  %v1582 = vpack.c.b16 %v1539, %v1538
  %v1583 = vpack.c.b16 %v1541, %v1540
  %v1584 = vpack.c.b16 %v1543, %v1542
  %v1585 = vpack.c.b16 %v1545, %v1544
  %v1586 = vpack.c.b16 %v1547, %v1546
  %v1587 = vpack.c.b16 %v1549, %v1548
  %v1588 = vpack.c.b16 %v1551, %v1550
  %v1589 = vpack.c.b16 %v1553, %v1552
  %v1590 = vpack.c.b16 %v1555, %v1554
  %v1591 = vpack.c.b16 %v1557, %v1556
  %v1592 = vpack.c.b16 %v1559, %v1558
  %v1593 = vpack.c.b16 %v1561, %v1560
  %v1594 = vpack.c.b16 %v1563, %v1562
  %v1595 = vpack.c.b16 %v1565, %v1564
  %v1596 = vpack.c.b16 %v1567, %v1566
  %v1597 = vpack.c.b16 %v1569, %v1568
  %v1598 = vpack.c.b16 %v1571, %v1570
  %v1599 = vpack.c.b16 %v1573, %v1572
  %v1600 = vpack.c.b16 %v1575, %v1574
  %v1601 = vpack.c.b16 %v1577, %v1576
  %1626 = vmatpush.bf16.msra.mxu0 %v1585
  %1627 = vmatpush.bf16.msra.mxu0 %v1584
  %1628 = vmatpush.bf16.msra.mxu0 %v1583
  %1629 = vmatpush.bf16.msra.mxu0 %v1582
  %1630 = vmatpush.bf16.msra.mxu0 %v1581
  %1631 = vmatpush.bf16.msra.mxu0 %v1580
  %1632 = vmatpush.bf16.msra.mxu0 %v1579
  %1633 = vmatpush.bf16.msra.mxu0 %v1578
  %1634 = vmatmul.bf16.gmra.mxu0 %v1405
  %v1635 = vpop.f32.mrf.mxu0
  %v1636 = vadd.f32 0.0, %v1635
  %v1637 = vpop.f32.mrf.mxu0
  %v1638 = vadd.f32 0.0, %v1637
  %1639 = vmatmul.bf16.gmra.mxu0 %v1406
  %v1640 = vpop.f32.mrf.mxu0
  %v1641 = vadd.f32 0.0, %v1640
  %v1642 = vpop.f32.mrf.mxu0
  %v1643 = vadd.f32 0.0, %v1642
  %1644 = vdwg.mxu0
  %1645 = vmatpush.bf16.msra.mxu0 %v1593
  %1646 = vmatpush.bf16.msra.mxu0 %v1592
  %1647 = vmatpush.bf16.msra.mxu0 %v1591
  %1648 = vmatpush.bf16.msra.mxu0 %v1590
  %1649 = vmatpush.bf16.msra.mxu0 %v1589
  %1650 = vmatpush.bf16.msra.mxu0 %v1588
  %1651 = vmatpush.bf16.msra.mxu0 %v1587
  %1652 = vmatpush.bf16.msra.mxu0 %v1586
  %1653 = vmatmul.bf16.gmra.mxu0 %v1417
  %v1654 = vpop.f32.mrf.mxu0
  %v1655 = vadd.f32 %v1636, %v1654
  %v1656 = vpop.f32.mrf.mxu0
  %v1657 = vadd.f32 %v1638, %v1656
  %1658 = vmatmul.bf16.gmra.mxu0 %v1418
  %v1659 = vpop.f32.mrf.mxu0
  %v1660 = vadd.f32 %v1641, %v1659
  %v1661 = vpop.f32.mrf.mxu0
  %v1662 = vadd.f32 %v1643, %v1661
  %1663 = vdwg.mxu0
  %1664 = vmatpush.bf16.msra.mxu0 %v1601
  %1665 = vmatpush.bf16.msra.mxu0 %v1600
  %1666 = vmatpush.bf16.msra.mxu0 %v1599
  %1667 = vmatpush.bf16.msra.mxu0 %v1598
  %1668 = vmatpush.bf16.msra.mxu0 %v1597
  %1669 = vmatpush.bf16.msra.mxu0 %v1596
  %1670 = vmatpush.bf16.msra.mxu0 %v1595
  %1671 = vmatpush.bf16.msra.mxu0 %v1594
  %1672 = vmatmul.bf16.gmra.mxu0 %v1429
  %v1673 = vpop.f32.mrf.mxu0
  %v1674 = vadd.f32 %v1655, %v1673
  %v1675 = vpop.f32.mrf.mxu0
  %v1676 = vadd.f32 %v1657, %v1675
  %1677 = vmatmul.bf16.gmra.mxu0 %v1430
  %v1678 = vpop.f32.mrf.mxu0
  %v1679 = vadd.f32 %v1660, %v1678
  %v1680 = vpop.f32.mrf.mxu0
  %v1681 = vadd.f32 %v1662, %v1680
  %1682 = vdwg.mxu0
  %v1683 = vadd.f32 %v1674, %v1676
  %v1684 = vadd.f32 %v1683, %v1679
  %v1685 = vadd.f32 %v1684, %v1681
  %v1686 = vrot.slane %v1685, 4
  %v1687 = vadd.f32 %v1685, %v1686
  %v1688 = vrot.slane %v1687, 2
  %v1689 = vadd.f32 %v1687, %v1688
  %v1690 = vrot.slane %v1689, 1
  %v1691 = vadd.f32 %v1689, %v1690
  %1692 = vmatpush.msra.mxu0 %v37
  %1693 = vmatpush.msra.mxu0 %v36
  %1694 = vmatpush.msra.mxu0 %v35
  %1695 = vmatpush.msra.mxu0 %v34
  %1696 = vmatpush.msra.mxu0 %v33
  %1697 = vmatpush.msra.mxu0 %v32
  %1698 = vmatpush.msra.mxu0 %v31
  %1699 = vmatpush.msra.mxu0 %v30
  %1700 = vmatpush.msra.mxu0 %v29
  %1701 = vmatpush.msra.mxu0 %v28
  %1702 = vmatpush.msra.mxu0 %v27
  %1703 = vmatpush.msra.mxu0 %v26
  %1704 = vmatpush.msra.mxu0 %v25
  %1705 = vmatpush.msra.mxu0 %v24
  %1706 = vmatpush.msra.mxu0 %v23
  %1707 = vmatpush.msra.mxu0 %v22
  %1708 = vmatmul.f32.gmra.mxu0 %v1691
  %v1709 = vpop.f32.mrf.mxu0
  %v1710 = vadd.f32 0.0, %v1709
  %1711 = vdwg.mxu0
  %v1712 = vmul.f32 %v1710, 0.001953125
  %v1713 = vperm.slane %v1712, 0
  %v1714 = vsub.f32 %v1674, %v1713
  %v1715 = vsub.f32 %v1676, %v1713
  %v1716 = vsub.f32 %v1679, %v1713
  %v1717 = vsub.f32 %v1681, %v1713
  %v1718 = vmul.f32 %v1714, %v1714
  %v1719 = vmul.f32 %v1715, %v1715
  %v1720 = vmul.f32 %v1716, %v1716
  %v1721 = vmul.f32 %v1717, %v1717
  %v1722 = vadd.f32 %v1718, %v1719
  %v1723 = vadd.f32 %v1722, %v1720
  %v1724 = vadd.f32 %v1723, %v1721
  %v1725 = vrot.slane %v1724, 4
  %v1726 = vadd.f32 %v1724, %v1725
  %v1727 = vrot.slane %v1726, 2
  %v1728 = vadd.f32 %v1726, %v1727
  %v1729 = vrot.slane %v1728, 1
  %v1730 = vadd.f32 %v1728, %v1729
  %1731 = vmatpush.msra.mxu0 %v37
  %1732 = vmatpush.msra.mxu0 %v36
  %1733 = vmatpush.msra.mxu0 %v35
  %1734 = vmatpush.msra.mxu0 %v34
  %1735 = vmatpush.msra.mxu0 %v33
  %1736 = vmatpush.msra.mxu0 %v32
  %1737 = vmatpush.msra.mxu0 %v31
  %1738 = vmatpush.msra.mxu0 %v30
  %1739 = vmatpush.msra.mxu0 %v29
  %1740 = vmatpush.msra.mxu0 %v28
  %1741 = vmatpush.msra.mxu0 %v27
  %1742 = vmatpush.msra.mxu0 %v26
  %1743 = vmatpush.msra.mxu0 %v25
  %1744 = vmatpush.msra.mxu0 %v24
  %1745 = vmatpush.msra.mxu0 %v23
  %1746 = vmatpush.msra.mxu0 %v22
  %1747 = vmatmul.f32.gmra.mxu0 %v1730
  %v1748 = vpop.f32.mrf.mxu0
  %v1749 = vadd.f32 0.0, %v1748
  %1750 = vdwg.mxu0
  %v1751 = vmul.f32 %v1749, 0.001953125
  %v1752 = vadd.f32 %v1751, 1e-05
  %v1753 = vrsqrt.pop %v1752
  %v1754 = vmul.f32 %v1753, %v1752
  %v1755 = vmul.f32 %v1754, %v1753
  %v1756 = vmul.f32 0.5, %v1755
  %v1757 = vsub.f32 1.5, %v1756
  %v1758 = vmul.f32 %v1753, %v1757
  %vm1759 = vweird.f32 %v1752
  %vm1760 = vweird.f32 %v1753
  %vm1761 = vmor %vm1759, %vm1760
  %v1762 = vsel %vm1761, %v1753, %v1758
  %v1764 = vrot.slane %v1762, 5
  %v1766 = vmul.f32 %v20, %v1764
  %v1767 = vperm.slane %v1766, 3
  %v1768 = vmul.f32 %v1714, %v1767
  %v1769 = vmul.f32 %v1715, %v1767
  %v1770 = vmul.f32 %v1716, %v1767
  %v1771 = vmul.f32 %v1717, %v1767
  %v1772 = vperm.slane %v21, 3
  %v1773 = vadd.f32 %v1768, %v1772
  %v1774 = vadd.f32 %v1769, %v1772
  %v1775 = vadd.f32 %v1770, %v1772
  %v1776 = vadd.f32 %v1771, %v1772
  %v1777 = vmax.f32 %v1773, 0.0
  %v1778 = vmax.f32 %v1774, 0.0
  %v1779 = vmax.f32 %v1775, 0.0
  %v1780 = vmax.f32 %v1776, 0.0
  %1781 = vst [vmem:[%s5] sm:$0xff] %v1777
  %1782 = vst [vmem:[%s5 + $0x8] sm:$0xff] %v1778
  %1783 = vst [vmem:[%s5 + $0x10] sm:$0xff] %v1779
  %1784 = vst [vmem:[%s5 + $0x18] sm:$0xff] %v1780
  // Predicated region
  $region22: #{_forward.1} parent=0 // pred_check
    _
  $region23: #{_forward.1} parent=0 // pred_check_branch
    %1786 = sbr.rel (0) target = $region25
  $region24: #{_forward.1} parent=0 // pred_region
    _
  $region25: #{_forward.1} parent=0 // pred_fallthru
    _
  // Predicated region
  $region26: #{_forward.1} parent=0 // pred_check
    _
  $region27: #{_forward.1} parent=0 // pred_check_branch
    %1788 = sbr.rel (0) target = $region29
  $region28: #{_forward.1} parent=0 // pred_region
    _
  $region29: #{_forward.1} parent=0 // pred_fallthru
    _

</llo_original>
